<compile_context>
chip_gen: v5e
topology: v5e:2x2
jax: 0.10.0
libtpu: 0.0.40
codegen_flags: <defaults>
</compile_context>

<pallas_src>
import jax
import jax.numpy as jnp
from jax.experimental import pallas as pl
from jax.experimental.pallas import tpu as pltpu

# Model hyper-parameters (consistent with TQNetwork's __init__ defaults).
STATE_SIZE = 8        # per-node feature size (in_channels of first BinaryTreeConv)
ACTION_SIZE = 4
TCNN_OUTPUT = 4       # tcnn_output
H1, H2 = 16, 8        # fixed hidden widths of the tcnn stack in the module
FC1, FC2 = 64, 64
NR = 7                # number of real tree nodes
L = NR + 1            # +1 for the tcnn zero-padding slot at flat index 0
EPS = 1e-5

PACK_COLS = 128       # fixed column width of the packed parameter buffer (lane tile);
                      # independent of the batch tile TB.


def _round8(n):
    return (n + 7) // 8 * 8


# Row layout of the single packed parameter buffer.  Each block is zero-padded to
# PACK_COLS columns and to a multiple-of-8 row count so every in-kernel slice starts
# on a sublane-tile boundary.
_BLOCK_ROWS = {
    "W1": H1 * L, "W2": H2 * L, "W3": TCNN_OUTPUT * L,     # fused gather+conv weights
    "FW1": FC1, "FW2": FC2, "FW3": ACTION_SIZE,            # fc weights (transposed)
    "B1": H1, "B2": H2, "B3": TCNN_OUTPUT,                 # conv biases, (C_out, L), node-0 masked
    "FB1": FC1, "FB2": FC2, "FB3": ACTION_SIZE,            # fc biases, (F, 1) columns
}
_ORDER = ["W1", "W2", "W3", "FW1", "FW2", "FW3",
          "B1", "B2", "B3", "FB1", "FB2", "FB3"]
OFF = {}
_row = 0
for _name in _ORDER:
    OFF[_name] = _row
    _row += _round8(_BLOCK_ROWS[_name])
TOTAL_ROWS = _row      # = 528


def tqnetwork_kernel(wp_ref, d_ref, out_ref):
    """Processes one tile of TB trees (batch on the lane axis)."""
    tb = d_ref.shape[1]

    def mm(a, b):
        return jnp.dot(a, b, preferred_element_type=jnp.float32)

    def tree_layer(d, w_name, b_name, c_out, k):
        rows = c_out * L
        w = wp_ref[OFF[w_name]:OFF[w_name] + rows, 0:k]         # fused gather + conv weight
        b2d = wp_ref[OFF[b_name]:OFF[b_name] + c_out, 0:L]      # (c_out, L); node-0 column == 0
        # (c_out*L, tb) -> (c_out, L, tb) is a pure view (L == 8 sublane tile).
        full = mm(w, d).reshape(c_out, L, tb) + b2d[:, :, None]  # node-0 rows stay exactly 0
        # TreeLayerNorm: mean / unbiased std over all (channel, node) elements per tree
        # (zero-padding node included).  Two-pass E[(x-mean)^2] form for robustness.
        n = float(rows)
        s1 = jnp.sum(full, axis=(0, 1), keepdims=True)           # (1, 1, tb)
        mean = s1 * (1.0 / n)
        centered = full - mean
        var = jnp.sum(centered * centered, axis=(0, 1), keepdims=True) * (1.0 / (n - 1.0))
        inv = pl.reciprocal(jnp.sqrt(var) + EPS, approx=True)    # EUP; tiny (1,1,tb) vector
        # TreeActivation(ReLU)
        return jnp.maximum(centered * inv, 0.0)                  # (c_out, L, tb)

    d1 = tree_layer(d_ref[...], "W1", "B1", H1, STATE_SIZE * L)          # (H1, L, tb)
    d2 = tree_layer(d1.reshape(H1 * L, tb), "W2", "B2", H2, H1 * L)      # (H2, L, tb)
    d3 = tree_layer(d2.reshape(H2 * L, tb), "W3", "B3", TCNN_OUTPUT, H2 * L)

    # DynamicPooling: max over the node axis (zero node included; post-ReLU all >= 0).
    pooled = jnp.max(d3, axis=1)                                 # (TCNN_OUTPUT, tb)

    def fc(x, w_name, b_name, m, k, relu):
        w = wp_ref[OFF[w_name]:OFF[w_name] + m, 0:k]
        b = wp_ref[OFF[b_name]:OFF[b_name] + m, 0:1]             # (m, 1) column; lane-broadcast add
        y = mm(w, x) + b
        return jnp.maximum(y, 0.0) if relu else y

    h = fc(pooled, "FW1", "FB1", FC1, TCNN_OUTPUT, True)
    h = fc(h, "FW2", "FB2", FC2, FC1, True)
    out_ref[...] = fc(h, "FW3", "FB3", ACTION_SIZE, FC2, False)  # (ACTION_SIZE, tb) lane-dense


def pack_params(params, gstack):
    """Fold the (batch-shared) tree-gather structure into the conv weights and pack all
    parameters into one (TOTAL_ROWS, PACK_COLS) f32 buffer.  Done once per (structure,
    params); amortized over every batch / call.

    gstack: (3, L, L) one-hot gather matrices; gstack[k, n, m] == 1 iff node n's k-th
    triple member (self/left/right) is flat node m; row n == 0 is all-zero.
    """
    f32 = jnp.float32
    node_mask = (jnp.arange(L) > 0).astype(f32)        # zero for the tcnn padding node

    def fold_conv(w):   # w: (3, C_in, C_out) -> (C_out*L, C_in*L)
        c_in, c_out = w.shape[1], w.shape[2]
        return jnp.einsum("kio,knm->onim", w, gstack).reshape(c_out * L, c_in * L)

    def conv_bias(b):   # b: (1, C_out) -> (C_out, L); node-0 column zero
        return b.reshape(-1, 1) * node_mask[None, :]

    def fc_bias(b):     # b: (1, F) -> (F, 1)
        return b.reshape(-1, 1)

    blocks = {
        "W1": fold_conv(params["w1"]), "W2": fold_conv(params["w2"]),
        "W3": fold_conv(params["w3"]),
        "FW1": params["fw1"].T, "FW2": params["fw2"].T, "FW3": params["fw3"].T,
        "B1": conv_bias(params["b1"]), "B2": conv_bias(params["b2"]),
        "B3": conv_bias(params["b3"]),
        "FB1": fc_bias(params["fb1"]), "FB2": fc_bias(params["fb2"]),
        "FB3": fc_bias(params["fb3"]),
    }
    padded = []
    for name in _ORDER:
        blk = blocks[name].astype(f32)
        padded.append(jnp.pad(blk, ((0, _round8(blk.shape[0]) - blk.shape[0]),
                                    (0, PACK_COLS - blk.shape[1]))))
    return jnp.concatenate(padded, axis=0)             # (TOTAL_ROWS, PACK_COLS)


def _pick_tb(bsz):
    """Largest lane-dense batch tile (<= 512) dividing bsz, preferring >= 2 grid steps
    so both v7x TensorCores get work.  bsz must be a multiple of 128."""
    cands = [tb for tb in (512, 384, 256, 128) if bsz % tb == 0]
    for tb in cands:
        if bsz // tb >= 2:
            return tb
    return cands[-1]


@jax.jit
def tqnetwork_forward_lanes(wpack, dmat):
    """Zero-relayout entry point.
    dmat: (STATE_SIZE*L, B) lane-major node features (row i*L+n = channel i of node n,
    node 0 = tcnn zero node).  B must be a multiple of 128.
    Returns (ACTION_SIZE, B) lane-major Q-values."""
    bsz = dmat.shape[1]
    assert bsz % 128 == 0, "lane-major batch must be a multiple of 128"
    tb = _pick_tb(bsz)
    return pl.pallas_call(
        tqnetwork_kernel,
        out_shape=jax.ShapeDtypeStruct((ACTION_SIZE, bsz), jnp.float32),
        grid=(bsz // tb,),
        in_specs=[
            # Constant index_map -> the param buffer is fetched once and reused across
            # grid steps.  (pipeline_mode=pl.Buffered(1) would drop the spare pipeline
            # buffer; left at default since capacity is nowhere near limiting.)
            pl.BlockSpec((TOTAL_ROWS, PACK_COLS), lambda b: (0, 0)),
            pl.BlockSpec((STATE_SIZE * L, tb), lambda b: (0, b)),     # per-tile tree features
        ],
        out_specs=pl.BlockSpec((ACTION_SIZE, tb), lambda b: (0, b)),  # lane-dense output tile
        compiler_params=pltpu.CompilerParams(
            dimension_semantics=("parallel",)),                       # shard tiles over TCs (v7x)
    )(wpack, dmat)


@jax.jit
def tqnetwork_forward(wpack, d0_batch):
    """Convenience wrapper.  d0_batch: (B, L, STATE_SIZE) per-tree node features
    (row 0 = tcnn zero node).  Returns (B, ACTION_SIZE).
    Note: for serving-scale batches prefer tqnetwork_forward_lanes with data produced
    directly in (S*L, B) layout to avoid these HBM relayout passes."""
    bsz = d0_batch.shape[0]
    padded = -(-bsz // 128) * 128
    # Layout plumbing: (B, L, S) -> (S*L, B); row i*L + n = channel i of node n.
    dmat = jnp.transpose(d0_batch, (2, 1, 0)).reshape(STATE_SIZE * L, bsz)
    if padded != bsz:
        dmat = jnp.pad(dmat, ((0, 0), (0, padded - bsz)))
    out_t = tqnetwork_forward_lanes(wpack, dmat)                      # (ACTION_SIZE, padded)
    return out_t[:, :bsz].T                                           # (B, ACTION_SIZE)


def ref_forward(d0_batch, idx, params):
    """Pure-JAX mirror of the PyTorch/tcnn forward (explicit gathers), for checking."""
    def single(d0_tree):
        def layer(d, w, b):
            conv = sum(d[idx[:, k]] @ w[k] for k in range(3)) + b[0]
            full = jnp.concatenate(
                [jnp.zeros((1, conv.shape[1]), jnp.float32), conv], axis=0)
            n = full.size
            mean = jnp.mean(full)
            var = jnp.sum((full - mean) ** 2) / (n - 1)
            normd = (full - mean) / (jnp.sqrt(var) + EPS)
            return jnp.maximum(normd, 0.0)

        d = layer(d0_tree, params["w1"], params["b1"])
        d = layer(d, params["w2"], params["b2"])
        d = layer(d, params["w3"], params["b3"])
        x = jnp.max(d, axis=0).reshape(1, -1)
        x = jnp.maximum(x @ params["fw1"] + params["fb1"], 0.0)
        x = jnp.maximum(x @ params["fw2"] + params["fb2"], 0.0)
        return (x @ params["fw3"] + params["fb3"])[0]

    return jax.vmap(single)(d0_batch)


if __name__ == "__main__":
    key = jax.random.PRNGKey(0)
    ks = jax.random.split(key, 13)

    # Tree structure: complete binary tree with 7 real nodes.  Flat indices 1..7 are
    # real nodes; 0 is the padding (missing-child) slot.  Shared across the batch.
    # (Per-sample differing structures would instead need scalar-prefetch gathers.)
    idx_rows = []
    for node in range(1, NR + 1):
        lc = 2 * node if 2 * node <= NR else 0
        rc = 2 * node + 1 if 2 * node + 1 <= NR else 0
        idx_rows.append([node, lc, rc])
    idx = jnp.array(idx_rows, dtype=jnp.int32)                  # (NR, 3)

    # One-hot gather matrices (3, L, L): row 0 all-zero; rows 1..NR select the k-th
    # member of each node's (self, left, right) triple.
    gstack = jnp.zeros((3, L, L), jnp.float32)
    for k in range(3):
        gstack = gstack.at[k, jnp.arange(1, L), idx[:, k]].set(1.0)

    def init(k, shape, scale=0.1):
        return scale * jax.random.normal(k, shape, jnp.float32)

    # Deterministic synthetic parameters.  Tree-conv weights are (3, C_in, C_out)
    # i.e. torch Conv1d weight (C_out, C_in, 3) transposed to w[k, i, o].
    params = dict(
        w1=init(ks[1], (3, STATE_SIZE, H1)),  b1=init(ks[2], (1, H1)),
        w2=init(ks[3], (3, H1, H2)),          b2=init(ks[4], (1, H2)),
        w3=init(ks[5], (3, H2, TCNN_OUTPUT)), b3=init(ks[6], (1, TCNN_OUTPUT)),
        fw1=init(ks[7], (TCNN_OUTPUT, FC1)),  fb1=init(ks[8], (1, FC1)),
        fw2=init(ks[9], (FC1, FC2)),          fb2=init(ks[10], (1, FC2)),
        fw3=init(ks[11], (FC2, ACTION_SIZE)), fb3=init(ks[12], (1, ACTION_SIZE)),
    )

    wpack = pack_params(params, gstack)       # built once; reused for every batch
    assert wpack.shape == (TOTAL_ROWS, PACK_COLS), wpack.shape

    # Check 1: large-ish batch -> TB=512, grid=2 (both v7x TCs busy).
    B1_ = 1024
    d0 = 0.1 * jax.random.normal(ks[0], (B1_, L, STATE_SIZE), jnp.float32)
    d0 = d0.at[:, 0, :].set(0.0)              # row 0 of each tree is the tcnn zero node
    out = jax.block_until_ready(tqnetwork_forward(wpack, d0))
    ref = ref_forward(d0, idx, params)
    assert out.shape == (B1_, ACTION_SIZE), out.shape
    assert jnp.allclose(out, ref, rtol=2e-3, atol=2e-3), \
        float(jnp.max(jnp.abs(out - ref)))

    # Check 2: ragged batch (padded to 256 inside the wrapper -> TB=128, grid=2).
    B2_ = 200
    d0b = 0.1 * jax.random.normal(jax.random.PRNGKey(1), (B2_, L, STATE_SIZE), jnp.float32)
    d0b = d0b.at[:, 0, :].set(0.0)
    outb = jax.block_until_ready(tqnetwork_forward(wpack, d0b))
    refb = ref_forward(d0b, idx, params)
    assert outb.shape == (B2_, ACTION_SIZE), outb.shape
    assert jnp.allclose(outb, refb, rtol=2e-3, atol=2e-3), \
        float(jnp.max(jnp.abs(outb - refb)))

    print("KERNEL_OK")
</pallas_src>

<mosaic_0001>
module attributes {stable_mosaic.version = 11 : i64} {
  func.func @tqnetwork_kernel(%arg0: i32, %arg1: memref<528x128xf32, #tpu.memory_space<vmem>>, %arg2: memref<64x512xf32, #tpu.memory_space<vmem>>, %arg3: memref<4x512xf32, #tpu.memory_space<vmem>>) attributes {dimension_semantics = [#tpu.dimension_semantics<parallel>], iteration_bounds = array<i64: 2>, scalar_prefetch = 0 : i64, scratch_operands = 0 : i64, tpu.core_type = #tpu.core_type<tc>, window_params = [{pipeline_mode = #tpu.pipeline_mode<synchronous>, transform_indices = @transform_0, window_bounds = array<i64: 528, 128>}, {transform_indices = @transform_1, window_bounds = array<i64: 64, 512>}, {transform_indices = @transform_2, window_bounds = array<i64: 4, 512>}]} {
    %c0 = arith.constant 0 : index
    %c0_0 = arith.constant 0 : index
    %0 = vector.load %arg2[%c0, %c0_0] : memref<64x512xf32, #tpu.memory_space<vmem>>, vector<64x512xf32>
    %c0_1 = arith.constant 0 : index
    %c0_2 = arith.constant 0 : index
    %1 = vector.load %arg1[%c0_1, %c0_2] : memref<528x128xf32, #tpu.memory_space<vmem>>, vector<128x64xf32>
    %c360 = arith.constant 360 : index
    %c0_3 = arith.constant 0 : index
    %2 = vector.load %arg1[%c360, %c0_3] : memref<528x128xf32, #tpu.memory_space<vmem>>, vector<16x8xf32>
    %cst = arith.constant dense<0.000000e+00> : vector<128x512xf32>
    %3 = tpu.matmul %1, %0, %cst {dimension_numbers = #tpu.dot_dimension_numbers<[1], [0], [0], [1], [0, 0, 1, 1], [], []>} : vector<128x64xf32>, vector<64x512xf32>, vector<128x512xf32> -> vector<128x512xf32>
    %4 = vector.shape_cast %3 : vector<128x512xf32> to vector<16x8x512xf32>
    %5 = vector.shape_cast %2 : vector<16x8xf32> to vector<16x8x1xf32>
    %6 = vector.broadcast %5 : vector<16x8x1xf32> to vector<16x8x512xf32>
    %7 = arith.addf %4, %6 : vector<16x8x512xf32>
    %cst_4 = arith.constant dense<0.000000e+00> : vector<512xf32>
    %8 = vector.multi_reduction <add>, %7, %cst_4 [0, 1] : vector<16x8x512xf32> to vector<512xf32>
    %9 = vector.shape_cast %8 : vector<512xf32> to vector<1x1x512xf32>
    %cst_5 = arith.constant 7.812500e-03 : f32
    %10 = vector.broadcast %cst_5 : f32 to vector<1x1x512xf32>
    %11 = arith.mulf %9, %10 : vector<1x1x512xf32>
    %12 = vector.broadcast %11 : vector<1x1x512xf32> to vector<16x8x512xf32>
    %13 = arith.subf %7, %12 : vector<16x8x512xf32>
    %14 = arith.mulf %13, %13 : vector<16x8x512xf32>
    %cst_6 = arith.constant dense<0.000000e+00> : vector<512xf32>
    %15 = vector.multi_reduction <add>, %14, %cst_6 [0, 1] : vector<16x8x512xf32> to vector<512xf32>
    %16 = vector.shape_cast %15 : vector<512xf32> to vector<1x1x512xf32>
    %cst_7 = arith.constant 0.00787401571 : f32
    %17 = vector.broadcast %cst_7 : f32 to vector<1x1x512xf32>
    %18 = arith.mulf %16, %17 : vector<1x1x512xf32>
    %19 = math.sqrt %18 : vector<1x1x512xf32>
    %cst_8 = arith.constant 9.99999974E-6 : f32
    %20 = vector.broadcast %cst_8 : f32 to vector<1x1x512xf32>
    %21 = arith.addf %19, %20 : vector<1x1x512xf32>
    %22 = tpu.reciprocal %21 {approx = true} : vector<1x1x512xf32> -> vector<1x1x512xf32>
    %23 = vector.broadcast %22 : vector<1x1x512xf32> to vector<16x8x512xf32>
    %24 = arith.mulf %13, %23 : vector<16x8x512xf32>
    %cst_9 = arith.constant 0.000000e+00 : f32
    %25 = vector.broadcast %cst_9 : f32 to vector<16x8x512xf32>
    %26 = arith.maximumf %24, %25 : vector<16x8x512xf32>
    %27 = vector.shape_cast %26 : vector<16x8x512xf32> to vector<128x512xf32>
    %c128 = arith.constant 128 : index
    %c0_10 = arith.constant 0 : index
    %28 = vector.load %arg1[%c128, %c0_10] : memref<528x128xf32, #tpu.memory_space<vmem>>, vector<64x128xf32>
    %c376 = arith.constant 376 : index
    %c0_11 = arith.constant 0 : index
    %29 = vector.load %arg1[%c376, %c0_11] : memref<528x128xf32, #tpu.memory_space<vmem>>, vector<8x8xf32>
    %cst_12 = arith.constant dense<0.000000e+00> : vector<64x512xf32>
    %30 = tpu.matmul %28, %27, %cst_12 {dimension_numbers = #tpu.dot_dimension_numbers<[1], [0], [0], [1], [0, 0, 1, 1], [], []>} : vector<64x128xf32>, vector<128x512xf32>, vector<64x512xf32> -> vector<64x512xf32>
    %31 = vector.shape_cast %30 : vector<64x512xf32> to vector<8x8x512xf32>
    %32 = vector.shape_cast %29 : vector<8x8xf32> to vector<8x8x1xf32>
    %33 = vector.broadcast %32 : vector<8x8x1xf32> to vector<8x8x512xf32>
    %34 = arith.addf %31, %33 : vector<8x8x512xf32>
    %cst_13 = arith.constant dense<0.000000e+00> : vector<512xf32>
    %35 = vector.multi_reduction <add>, %34, %cst_13 [0, 1] : vector<8x8x512xf32> to vector<512xf32>
    %36 = vector.shape_cast %35 : vector<512xf32> to vector<1x1x512xf32>
    %cst_14 = arith.constant 1.562500e-02 : f32
    %37 = vector.broadcast %cst_14 : f32 to vector<1x1x512xf32>
    %38 = arith.mulf %36, %37 : vector<1x1x512xf32>
    %39 = vector.broadcast %38 : vector<1x1x512xf32> to vector<8x8x512xf32>
    %40 = arith.subf %34, %39 : vector<8x8x512xf32>
    %41 = arith.mulf %40, %40 : vector<8x8x512xf32>
    %cst_15 = arith.constant dense<0.000000e+00> : vector<512xf32>
    %42 = vector.multi_reduction <add>, %41, %cst_15 [0, 1] : vector<8x8x512xf32> to vector<512xf32>
    %43 = vector.shape_cast %42 : vector<512xf32> to vector<1x1x512xf32>
    %cst_16 = arith.constant 0.0158730168 : f32
    %44 = vector.broadcast %cst_16 : f32 to vector<1x1x512xf32>
    %45 = arith.mulf %43, %44 : vector<1x1x512xf32>
    %46 = math.sqrt %45 : vector<1x1x512xf32>
    %cst_17 = arith.constant 9.99999974E-6 : f32
    %47 = vector.broadcast %cst_17 : f32 to vector<1x1x512xf32>
    %48 = arith.addf %46, %47 : vector<1x1x512xf32>
    %49 = tpu.reciprocal %48 {approx = true} : vector<1x1x512xf32> -> vector<1x1x512xf32>
    %50 = vector.broadcast %49 : vector<1x1x512xf32> to vector<8x8x512xf32>
    %51 = arith.mulf %40, %50 : vector<8x8x512xf32>
    %cst_18 = arith.constant 0.000000e+00 : f32
    %52 = vector.broadcast %cst_18 : f32 to vector<8x8x512xf32>
    %53 = arith.maximumf %51, %52 : vector<8x8x512xf32>
    %54 = vector.shape_cast %53 : vector<8x8x512xf32> to vector<64x512xf32>
    %c192 = arith.constant 192 : index
    %c0_19 = arith.constant 0 : index
    %55 = vector.load %arg1[%c192, %c0_19] : memref<528x128xf32, #tpu.memory_space<vmem>>, vector<32x64xf32>
    %c384 = arith.constant 384 : index
    %c0_20 = arith.constant 0 : index
    %56 = vector.load %arg1[%c384, %c0_20] : memref<528x128xf32, #tpu.memory_space<vmem>>, vector<4x8xf32>
    %cst_21 = arith.constant dense<0.000000e+00> : vector<32x512xf32>
    %57 = tpu.matmul %55, %54, %cst_21 {dimension_numbers = #tpu.dot_dimension_numbers<[1], [0], [0], [1], [0, 0, 1, 1], [], []>} : vector<32x64xf32>, vector<64x512xf32>, vector<32x512xf32> -> vector<32x512xf32>
    %58 = vector.shape_cast %57 : vector<32x512xf32> to vector<4x8x512xf32>
    %59 = vector.shape_cast %56 : vector<4x8xf32> to vector<4x8x1xf32>
    %60 = vector.broadcast %59 : vector<4x8x1xf32> to vector<4x8x512xf32>
    %61 = arith.addf %58, %60 : vector<4x8x512xf32>
    %cst_22 = arith.constant dense<0.000000e+00> : vector<512xf32>
    %62 = vector.multi_reduction <add>, %61, %cst_22 [0, 1] : vector<4x8x512xf32> to vector<512xf32>
    %63 = vector.shape_cast %62 : vector<512xf32> to vector<1x1x512xf32>
    %cst_23 = arith.constant 3.125000e-02 : f32
    %64 = vector.broadcast %cst_23 : f32 to vector<1x1x512xf32>
    %65 = arith.mulf %63, %64 : vector<1x1x512xf32>
    %66 = vector.broadcast %65 : vector<1x1x512xf32> to vector<4x8x512xf32>
    %67 = arith.subf %61, %66 : vector<4x8x512xf32>
    %68 = arith.mulf %67, %67 : vector<4x8x512xf32>
    %cst_24 = arith.constant dense<0.000000e+00> : vector<512xf32>
    %69 = vector.multi_reduction <add>, %68, %cst_24 [0, 1] : vector<4x8x512xf32> to vector<512xf32>
    %70 = vector.shape_cast %69 : vector<512xf32> to vector<1x1x512xf32>
    %cst_25 = arith.constant 0.0322580636 : f32
    %71 = vector.broadcast %cst_25 : f32 to vector<1x1x512xf32>
    %72 = arith.mulf %70, %71 : vector<1x1x512xf32>
    %73 = math.sqrt %72 : vector<1x1x512xf32>
    %cst_26 = arith.constant 9.99999974E-6 : f32
    %74 = vector.broadcast %cst_26 : f32 to vector<1x1x512xf32>
    %75 = arith.addf %73, %74 : vector<1x1x512xf32>
    %76 = tpu.reciprocal %75 {approx = true} : vector<1x1x512xf32> -> vector<1x1x512xf32>
    %77 = vector.broadcast %76 : vector<1x1x512xf32> to vector<4x8x512xf32>
    %78 = arith.mulf %67, %77 : vector<4x8x512xf32>
    %cst_27 = arith.constant 0.000000e+00 : f32
    %79 = vector.broadcast %cst_27 : f32 to vector<4x8x512xf32>
    %80 = arith.maximumf %78, %79 : vector<4x8x512xf32>
    %cst_28 = arith.constant dense<0xFF800000> : vector<4x512xf32>
    %81 = vector.multi_reduction <maximumf>, %80, %cst_28 [1] : vector<4x8x512xf32> to vector<4x512xf32>
    %c224 = arith.constant 224 : index
    %c0_29 = arith.constant 0 : index
    %82 = vector.load %arg1[%c224, %c0_29] : memref<528x128xf32, #tpu.memory_space<vmem>>, vector<64x4xf32>
    %c392 = arith.constant 392 : index
    %c0_30 = arith.constant 0 : index
    %83 = vector.load %arg1[%c392, %c0_30] : memref<528x128xf32, #tpu.memory_space<vmem>>, vector<64x1xf32>
    %cst_31 = arith.constant dense<0.000000e+00> : vector<64x512xf32>
    %84 = tpu.matmul %82, %81, %cst_31 {dimension_numbers = #tpu.dot_dimension_numbers<[1], [0], [0], [1], [0, 0, 1, 1], [], []>} : vector<64x4xf32>, vector<4x512xf32>, vector<64x512xf32> -> vector<64x512xf32>
    %85 = vector.broadcast %83 : vector<64x1xf32> to vector<64x512xf32>
    %86 = arith.addf %84, %85 : vector<64x512xf32>
    %cst_32 = arith.constant 0.000000e+00 : f32
    %87 = vector.broadcast %cst_32 : f32 to vector<64x512xf32>
    %88 = arith.maximumf %86, %87 : vector<64x512xf32>
    %c288 = arith.constant 288 : index
    %c0_33 = arith.constant 0 : index
    %89 = vector.load %arg1[%c288, %c0_33] : memref<528x128xf32, #tpu.memory_space<vmem>>, vector<64x64xf32>
    %c456 = arith.constant 456 : index
    %c0_34 = arith.constant 0 : index
    %90 = vector.load %arg1[%c456, %c0_34] : memref<528x128xf32, #tpu.memory_space<vmem>>, vector<64x1xf32>
    %cst_35 = arith.constant dense<0.000000e+00> : vector<64x512xf32>
    %91 = tpu.matmul %89, %88, %cst_35 {dimension_numbers = #tpu.dot_dimension_numbers<[1], [0], [0], [1], [0, 0, 1, 1], [], []>} : vector<64x64xf32>, vector<64x512xf32>, vector<64x512xf32> -> vector<64x512xf32>
    %92 = vector.broadcast %90 : vector<64x1xf32> to vector<64x512xf32>
    %93 = arith.addf %91, %92 : vector<64x512xf32>
    %cst_36 = arith.constant 0.000000e+00 : f32
    %94 = vector.broadcast %cst_36 : f32 to vector<64x512xf32>
    %95 = arith.maximumf %93, %94 : vector<64x512xf32>
    %c352 = arith.constant 352 : index
    %c0_37 = arith.constant 0 : index
    %96 = vector.load %arg1[%c352, %c0_37] : memref<528x128xf32, #tpu.memory_space<vmem>>, vector<4x64xf32>
    %c520 = arith.constant 520 : index
    %c0_38 = arith.constant 0 : index
    %97 = vector.load %arg1[%c520, %c0_38] : memref<528x128xf32, #tpu.memory_space<vmem>>, vector<4x1xf32>
    %cst_39 = arith.constant dense<0.000000e+00> : vector<4x512xf32>
    %98 = tpu.matmul %96, %95, %cst_39 {dimension_numbers = #tpu.dot_dimension_numbers<[1], [0], [0], [1], [0, 0, 1, 1], [], []>} : vector<4x64xf32>, vector<64x512xf32>, vector<4x512xf32> -> vector<4x512xf32>
    %99 = vector.broadcast %97 : vector<4x1xf32> to vector<4x512xf32>
    %100 = arith.addf %98, %99 : vector<4x512xf32>
    %c0_40 = arith.constant 0 : index
    %c0_41 = arith.constant 0 : index
    %101 = vector.load %arg3[%c0_40, %c0_41] : memref<4x512xf32, #tpu.memory_space<vmem>>, vector<4x512xf32>
    tpu.vector_store %arg3[%c0_40, %c0_41], %100 {strides = array<i32>} : memref<4x512xf32, #tpu.memory_space<vmem>>, vector<4x512xf32>,
    return
  }
  func.func @transform_0(%arg0: i32) -> (i32, i32) {
    %c0_i32 = arith.constant 0 : i32
    %c0_i32_0 = arith.constant 0 : i32
    %c0_i32_1 = arith.constant 0 : i32
    return %c0_i32, %c0_i32_0 : i32, i32
  }
  func.func @transform_1(%arg0: i32) -> (i32, i32) {
    %c0_i32 = arith.constant 0 : i32
    %c0_i32_0 = arith.constant 0 : i32
    return %c0_i32, %arg0 : i32, i32
  }
  func.func @transform_2(%arg0: i32) -> (i32, i32) {
    %c0_i32 = arith.constant 0 : i32
    %c0_i32_0 = arith.constant 0 : i32
    return %c0_i32, %arg0 : i32, i32
  }
}

</mosaic_0001>

<llo_original>
// kernel: tqnetwork_forward_lanes.1
$region0: #{tqnetwork_forward_lanes.1}
  #allocation0 [shape = 'u32[]', space=smem, size = 0x4, offset = 0x4, fixed_abs, tag = 'smem constant byte address 0x4 - core index']
  #allocation1 [shape = 'u32[72,128]{1,0:T(1,128)}', space=vmem, size = 0x9000, scoped, tag = 'internal scratch']
  %s0 = inlined_call_operand.hbm [shape: f32[528,128], index: 0, kind: input, shape index: {}]
  %s1 = inlined_call_operand.hbm [shape: f32[64,1024], index: 1, kind: input, shape index: {}]
  %s2 = inlined_call_operand.hbm [shape: f32[4,1024], index: 2, kind: output, shape index: {}]
  %s3 = sld [smem:[#allocation0]]
  $region49: #{tqnetwork_forward_lanes.1} parent=0
    _
  %s5 = ssub.s32 1, %s3
  %s6 = scalar_select 0, %s5, %s3
  $region1: #{tqnetwork_forward_lanes.1} parent=0
    #allocation2 [shape = 'u8[270336]{0}', space=vmem, size = 0x42000, scoped, tag = 'input window, operand 0, single buffered']
    #allocation3 [shape = 's32[2]{0}', space=sflag, size = 0x8, scoped, tag = 'scoped memory for tqnetwork_forward_lanes.1']
    #allocation4 [shape = 's32[2]{0}', space=sflag, size = 0x8, scoped, tag = 'scoped memory for tqnetwork_forward_lanes.1']
    #allocation5 [shape = 'u8[262144]{0}', space=vmem, size = 0x40000, scoped, tag = 'input window, operand 1']
    #allocation6 [shape = 's32[2]{0}', space=sflag, size = 0x8, scoped, tag = 'scoped memory for tqnetwork_forward_lanes.1']
    #allocation7 [shape = 'u8[16384]{0}', space=vmem, size = 0x4000, scoped, tag = 'output window, operand 0']
    %7 = vsyncpa [#allocation3], 0
    %8 = vsyncpa [#allocation6], 0
    %s9 = scalar_lea.sflag [#allocation6], 1
    %10 = vsyncpa %s9, 0
    %11 = vsyncpa [#allocation4], 0
    %s12 = scalar_lea.sflag [#allocation4], 1
    %13 = vsyncpa %s12, 0
    loop: start=0, step=1, limit=4
    $region2: #{tqnetwork_forward_lanes.1} parent=1 // loop_pre_header
      _
    $region3: #{tqnetwork_forward_lanes.1} parent=1 // loop_header
      %s15 = sphi 0, %s19
      %p16 = scmp.ge.s32.totalorder %s15, 4
      %s23 = sphi 0, %s23
      %s25 = sphi 0, %s23
      %s26 = sphi 0, %s25
      %s40 = sphi 0, %s26
      %s46 = sphi 0, %s48
      %s49 = sphi 0, %s46
      %s50 = sphi 0, %s49
      %s66 = sphi 0, %s50
      %s72 = sphi 0, %s74
      %s75 = sphi 0, %s72
      %s76 = sphi 0, %s75
      %s92 = sphi 0, %s76
    $region4: #{tqnetwork_forward_lanes.1} parent=1 // loop_header_branch
      %18 = sbr.rel (%p16) target = $region8
    $region5: #{tqnetwork_forward_lanes.1} parent=1 // loop_body
      %s20 = ssub.s32 %s15, 1
      %s21 = ssub.s32 %s15, 2
      %s22 = sadd.s32 %s15, 1
      %s24 = sadd.s32 %s23, 1
      %p27 = scmp.eq.s32.totalorder %s15, 1
      %p28 = scmp.ne.s32.totalorder %s23, %s25
      %p29 = scmp.eq.s32.totalorder %s15, 0
      %p30 = por %p28, %p29
      %p31 = scmp.ne.s32.totalorder %s23, %s25
      %p32 = scmp.eq.s32.totalorder %s20, 1
      %p33 = por %p31, %p32
      %p34 = scmp.ne.s32.totalorder %s25, %s26
      %p35 = scmp.eq.s32.totalorder %s20, 0
      %p36 = por %p34, %p35
      %p37 = scmp.ne.s32.totalorder %s25, %s26
      %p38 = scmp.eq.s32.totalorder %s21, 1
      %p39 = por %p37, %p38
      %p41 = scmp.ne.s32.totalorder %s26, %s40
      %p42 = scmp.eq.s32.totalorder %s21, 0
      %p43 = por %p41, %p42
      %s44 = ssub.s32 %s15, %s22
      %p45 = scmp.eq.s32.totalorder %s44, 0
      %s47 = sadd.s32 %s46, 1
      %s48 = scalar_select %p45, %s46, %s47
      %p51 = pneg %p45
      %p52 = scmp.eq.s32.totalorder %s15, 1
      %p53 = por %p51, %p52
      %p54 = scmp.ne.s32.totalorder %s46, %s49
      %p55 = scmp.eq.s32.totalorder %s15, 0
      %p56 = por %p54, %p55
      %p57 = scmp.ne.s32.totalorder %s46, %s49
      %p58 = scmp.eq.s32.totalorder %s20, 1
      %p59 = por %p57, %p58
      %p60 = scmp.ne.s32.totalorder %s49, %s50
      %p61 = scmp.eq.s32.totalorder %s20, 0
      %p62 = por %p60, %p61
      %p63 = scmp.ne.s32.totalorder %s49, %s50
      %p64 = scmp.eq.s32.totalorder %s21, 1
      %p65 = por %p63, %p64
      %p67 = scmp.ne.s32.totalorder %s50, %s66
      %p68 = scmp.eq.s32.totalorder %s21, 0
      %p69 = por %p67, %p68
      %s70 = ssub.s32 %s15, %s22
      %p71 = scmp.eq.s32.totalorder %s70, 0
      %s73 = sadd.s32 %s72, 1
      %s74 = scalar_select %p71, %s72, %s73
      %p77 = pneg %p71
      %p78 = scmp.eq.s32.totalorder %s15, 1
      %p79 = por %p77, %p78
      %p80 = scmp.ne.s32.totalorder %s72, %s75
      %p81 = scmp.eq.s32.totalorder %s15, 0
      %p82 = por %p80, %p81
      %p83 = scmp.ne.s32.totalorder %s72, %s75
      %p84 = scmp.eq.s32.totalorder %s20, 1
      %p85 = por %p83, %p84
      %p86 = scmp.ne.s32.totalorder %s75, %s76
      %p87 = scmp.eq.s32.totalorder %s20, 0
      %p88 = por %p86, %p87
      %p89 = scmp.ne.s32.totalorder %s75, %s76
      %p90 = scmp.eq.s32.totalorder %s21, 1
      %p91 = por %p89, %p90
      %p93 = scmp.ne.s32.totalorder %s76, %s92
      %p94 = scmp.eq.s32.totalorder %s21, 0
      %p95 = por %p93, %p94
      %p96 = scmp.le.s32.totalorder 1, %s15
      %p97 = scmp.lt.s32.totalorder %s15, 3
      %p98 = pnand %p96, %p97
      %p99 = pneg %p98
      // Predicated region
      $region9: #{tqnetwork_forward_lanes.1} parent=5 // pred_check
        _
      $region10: #{tqnetwork_forward_lanes.1} parent=5 // pred_check_branch
        %101 = sbr.rel (%p98) target = $region12
      $region11: #{tqnetwork_forward_lanes.1} parent=5 // pred_region
        %s102 = ssub.s32 %s15, 1
        // Predicated region
        $region13: #{tqnetwork_forward_lanes.1} parent=11 // pred_check
          %p103 = pneg %p36
        $region14: #{tqnetwork_forward_lanes.1} parent=11 // pred_check_branch
          %105 = sbr.rel (%p103) target = $region16
        $region15: #{tqnetwork_forward_lanes.1} parent=11 // pred_region
          %107 = vsyncadd [#allocation3], 0
          %s108 = sshll.u32 %s0, 4
          %s109 = int_to_ptr.hbm [resolvable:$true] %s108
          %s110 = sshll.u32 [#allocation2], 4
          %s111 = int_to_ptr.vmem [resolvable:$true] %s110
          %116 = dma.hbm_to_vmem [thread:$0]  %s109, 8448, %s111, [#allocation3], 128, 128, 8
        $region16: #{tqnetwork_forward_lanes.1} parent=11 // pred_fallthru
          _
      $region12: #{tqnetwork_forward_lanes.1} parent=5 // pred_fallthru
        _
      %p117 = scmp.lt.s32.totalorder %s15, 2
      // Predicated region
      $region17: #{tqnetwork_forward_lanes.1} parent=5 // pred_check
        %p118 = pneg %p117
      $region18: #{tqnetwork_forward_lanes.1} parent=5 // pred_check_branch
        %120 = sbr.rel (%p118) target = $region20
      $region19: #{tqnetwork_forward_lanes.1} parent=5 // pred_region
        // Predicated region
        $region21: #{tqnetwork_forward_lanes.1} parent=19 // pred_check
          %p121 = pneg %p56
        $region22: #{tqnetwork_forward_lanes.1} parent=19 // pred_check_branch
          %123 = sbr.rel (%p121) target = $region24
        $region23: #{tqnetwork_forward_lanes.1} parent=19 // pred_region
          %s124 = sand.u32 %s46, 1
          %s125 = scalar_lea.sflag [#allocation6], %s124
          %s126 = sand.u32 %s46, 1
          %s127 = smul.addr %s126, 256
          %s128 = scalar_lea.vmem [#allocation5], %s127
          %s129 = smul.u32 4, %s15
          %131 = vsyncadd %s125, 0
          %s132 = smul.addr %s129, 8
          %s133 = scalar_lea.hbm %s1, %s132
          %s134 = sshll.u32 %s133, 4
          %s135 = int_to_ptr.hbm [resolvable:$true] %s134
          %s136 = sshll.u32 %s128, 4
          %s137 = int_to_ptr.vmem [resolvable:$true] %s136
          %142 = dma.hbm_to_vmem [thread:$0]  %s135, 4096, %s137, %s125, 1024, 512, 32
        $region24: #{tqnetwork_forward_lanes.1} parent=19 // pred_fallthru
          _
      $region20: #{tqnetwork_forward_lanes.1} parent=5 // pred_fallthru
        _
      %p143 = scmp.le.s32.totalorder 1, %s15
      %p144 = scmp.lt.s32.totalorder %s15, 3
      %p145 = pnand %p143, %p144
      %p146 = pneg %p145
      // Predicated region
      $region25: #{tqnetwork_forward_lanes.1} parent=5 // pred_check
        _
      $region26: #{tqnetwork_forward_lanes.1} parent=5 // pred_check_branch
        %148 = sbr.rel (%p145) target = $region28
      $region27: #{tqnetwork_forward_lanes.1} parent=5 // pred_region
        %s149 = ssub.s32 %s15, 1
        // Predicated region
        $region29: #{tqnetwork_forward_lanes.1} parent=27 // pred_check
          %p150 = pneg %p36
        $region30: #{tqnetwork_forward_lanes.1} parent=27 // pred_check_branch
          %152 = sbr.rel (%p150) target = $region32
        $region31: #{tqnetwork_forward_lanes.1} parent=27 // pred_region
          %154 = dma.done [#allocation3], 8448
        $region32: #{tqnetwork_forward_lanes.1} parent=27 // pred_fallthru
          _
        %s155 = sand.u32 %s49, 1
        %s156 = scalar_lea.sflag [#allocation6], %s155
        %s157 = sand.u32 %s49, 1
        %s158 = smul.addr %s157, 256
        %s159 = scalar_lea.vmem [#allocation5], %s158
        // Predicated region
        $region33: #{tqnetwork_forward_lanes.1} parent=27 // pred_check
          %p160 = pneg %p62
        $region34: #{tqnetwork_forward_lanes.1} parent=27 // pred_check_branch
          %162 = sbr.rel (%p160) target = $region36
        $region35: #{tqnetwork_forward_lanes.1} parent=27 // pred_region
          %164 = dma.done %s156, 4096
        $region36: #{tqnetwork_forward_lanes.1} parent=27 // pred_fallthru
          _
        %p165 = pneg %p36
        %p166 = pneg %p33
        %s167 = sand.u32 %s49, 1
        %s168 = scalar_lea.sflag [#allocation6], %s167
        %s169 = sand.u32 %s49, 1
        %s170 = smul.addr %s169, 256
        %s171 = scalar_lea.vmem [#allocation5], %s170
        %p172 = pneg %p62
        %p173 = pneg %p59
        %p174 = pneg %p88
        %p175 = pneg %p85
        %s176 = sand.u32 %s75, 1
        %s177 = scalar_lea.sflag [#allocation4], %s176
        %s178 = sand.u32 %s75, 1
        %s179 = smul.addr %s178, 16
        %s180 = scalar_lea.vmem [#allocation7], %s179
        %s181 = smul.u32 4, %s20
        %s182 = smul.u32 4, %s20
        %v183 = vld [vmem:[%s159] sm:$0xff]
        %v184 = vld [vmem:[%s159 + $0x8] sm:$0xff]
        %v185 = vld [vmem:[%s159 + $0x10] sm:$0xff]
        %v186 = vld [vmem:[%s159 + $0x18] sm:$0xff]
        %v187 = vld [vmem:[%s159 + $0x20] sm:$0xff]
        %v188 = vld [vmem:[%s159 + $0x28] sm:$0xff]
        %v189 = vld [vmem:[%s159 + $0x30] sm:$0xff]
        %v190 = vld [vmem:[%s159 + $0x38] sm:$0xff]
        %v191 = vld [vmem:[%s159 + $0x40] sm:$0xff]
        %v192 = vld [vmem:[%s159 + $0x48] sm:$0xff]
        %v193 = vld [vmem:[%s159 + $0x50] sm:$0xff]
        %v194 = vld [vmem:[%s159 + $0x58] sm:$0xff]
        %v195 = vld [vmem:[%s159 + $0x60] sm:$0xff]
        %v196 = vld [vmem:[%s159 + $0x68] sm:$0xff]
        %v197 = vld [vmem:[%s159 + $0x70] sm:$0xff]
        %v198 = vld [vmem:[%s159 + $0x78] sm:$0xff]
        %v199 = vld [vmem:[%s159 + $0x80] sm:$0xff]
        %v200 = vld [vmem:[%s159 + $0x88] sm:$0xff]
        %v201 = vld [vmem:[%s159 + $0x90] sm:$0xff]
        %v202 = vld [vmem:[%s159 + $0x98] sm:$0xff]
        %v203 = vld [vmem:[%s159 + $0xa0] sm:$0xff]
        %v204 = vld [vmem:[%s159 + $0xa8] sm:$0xff]
        %v205 = vld [vmem:[%s159 + $0xb0] sm:$0xff]
        %v206 = vld [vmem:[%s159 + $0xb8] sm:$0xff]
        %v207 = vld [vmem:[%s159 + $0xc0] sm:$0xff]
        %v208 = vld [vmem:[%s159 + $0xc8] sm:$0xff]
        %v209 = vld [vmem:[%s159 + $0xd0] sm:$0xff]
        %v210 = vld [vmem:[%s159 + $0xd8] sm:$0xff]
        %v211 = vld [vmem:[%s159 + $0xe0] sm:$0xff]
        %v212 = vld [vmem:[%s159 + $0xe8] sm:$0xff]
        %v213 = vld [vmem:[%s159 + $0xf0] sm:$0xff]
        %v214 = vld [vmem:[%s159 + $0xf8] sm:$0xff]
        %v215 = vld [vmem:[#allocation2] sm:$0xff]
        %v216 = vld [vmem:[#allocation2 + $0x8] sm:$0xff]
        %v217 = vld [vmem:[#allocation2 + $0x10] sm:$0xff]
        %v218 = vld [vmem:[#allocation2 + $0x18] sm:$0xff]
        %v219 = vld [vmem:[#allocation2 + $0x20] sm:$0xff]
        %v220 = vld [vmem:[#allocation2 + $0x28] sm:$0xff]
        %v221 = vld [vmem:[#allocation2 + $0x30] sm:$0xff]
        %v222 = vld [vmem:[#allocation2 + $0x38] sm:$0xff]
        %v223 = vld [vmem:[#allocation2 + $0x40] sm:$0xff]
        %v224 = vld [vmem:[#allocation2 + $0x48] sm:$0xff]
        %v225 = vld [vmem:[#allocation2 + $0x50] sm:$0xff]
        %v226 = vld [vmem:[#allocation2 + $0x58] sm:$0xff]
        %v227 = vld [vmem:[#allocation2 + $0x60] sm:$0xff]
        %v228 = vld [vmem:[#allocation2 + $0x68] sm:$0xff]
        %v229 = vld [vmem:[#allocation2 + $0x70] sm:$0xff]
        %v230 = vld [vmem:[#allocation2 + $0x78] sm:$0xff]
        %v231 = vld [vmem:[#allocation2 + $0x168] sm:$0xff]
        %v232 = vld [vmem:[#allocation2 + $0x170] sm:$0xff]
        %vm233 = vcmask 523264
        %v235 = vsel %vm233, %v215, 0
        %v238 = vsel %vm233, %v216, 0
        %v241 = vsel %vm233, %v217, 0
        %v244 = vsel %vm233, %v218, 0
        %v247 = vsel %vm233, %v219, 0
        %v250 = vsel %vm233, %v220, 0
        %v253 = vsel %vm233, %v221, 0
        %v256 = vsel %vm233, %v222, 0
        %v259 = vsel %vm233, %v223, 0
        %v262 = vsel %vm233, %v224, 0
        %v265 = vsel %vm233, %v225, 0
        %v268 = vsel %vm233, %v226, 0
        %v271 = vsel %vm233, %v227, 0
        %v274 = vsel %vm233, %v228, 0
        %v277 = vsel %vm233, %v229, 0
        %v280 = vsel %vm233, %v230, 0
        %282 = vmatpush.msra.mxu0 0.0
        %283 = vmatpush.msra.mxu0 0.0
        %284 = vmatpush.msra.mxu0 0.0
        %285 = vmatpush.msra.mxu0 0.0
        %286 = vmatpush.msra.mxu0 0.0
        %287 = vmatpush.msra.mxu0 0.0
        %288 = vmatpush.msra.mxu0 0.0
        %289 = vmatpush.msra.mxu0 0.0
        %290 = vmatpush.msra.mxu0 %v211
        %291 = vmatpush.msra.mxu0 %v207
        %292 = vmatpush.msra.mxu0 %v203
        %293 = vmatpush.msra.mxu0 %v199
        %294 = vmatpush.msra.mxu0 %v195
        %295 = vmatpush.msra.mxu0 %v191
        %296 = vmatpush.msra.mxu0 %v187
        %297 = vmatpush.msra.mxu0 %v183
        %298 = vmatmul.f32.gmra.mxu0 %v235
        %v299 = vpop.f32.mrf.mxu0
        %v300 = vadd.f32 0.0, %v299
        %301 = vmatmul.f32.gmra.mxu0 %v238
        %v302 = vpop.f32.mrf.mxu0
        %v303 = vadd.f32 0.0, %v302
        %304 = vmatmul.f32.gmra.mxu0 %v241
        %v305 = vpop.f32.mrf.mxu0
        %v306 = vadd.f32 0.0, %v305
        %307 = vmatmul.f32.gmra.mxu0 %v244
        %v308 = vpop.f32.mrf.mxu0
        %v309 = vadd.f32 0.0, %v308
        %310 = vmatmul.f32.gmra.mxu0 %v247
        %v311 = vpop.f32.mrf.mxu0
        %v312 = vadd.f32 0.0, %v311
        %313 = vmatmul.f32.gmra.mxu0 %v250
        %v314 = vpop.f32.mrf.mxu0
        %v315 = vadd.f32 0.0, %v314
        %316 = vmatmul.f32.gmra.mxu0 %v253
        %v317 = vpop.f32.mrf.mxu0
        %v318 = vadd.f32 0.0, %v317
        %319 = vmatmul.f32.gmra.mxu0 %v256
        %v320 = vpop.f32.mrf.mxu0
        %v321 = vadd.f32 0.0, %v320
        %322 = vmatmul.f32.gmra.mxu0 %v259
        %v323 = vpop.f32.mrf.mxu0
        %v324 = vadd.f32 0.0, %v323
        %325 = vmatmul.f32.gmra.mxu0 %v262
        %v326 = vpop.f32.mrf.mxu0
        %v327 = vadd.f32 0.0, %v326
        %328 = vmatmul.f32.gmra.mxu0 %v265
        %v329 = vpop.f32.mrf.mxu0
        %v330 = vadd.f32 0.0, %v329
        %331 = vmatmul.f32.gmra.mxu0 %v268
        %v332 = vpop.f32.mrf.mxu0
        %v333 = vadd.f32 0.0, %v332
        %334 = vmatmul.f32.gmra.mxu0 %v271
        %v335 = vpop.f32.mrf.mxu0
        %v336 = vadd.f32 0.0, %v335
        %337 = vmatmul.f32.gmra.mxu0 %v274
        %v338 = vpop.f32.mrf.mxu0
        %v339 = vadd.f32 0.0, %v338
        %340 = vmatmul.f32.gmra.mxu0 %v277
        %v341 = vpop.f32.mrf.mxu0
        %v342 = vadd.f32 0.0, %v341
        %343 = vmatmul.f32.gmra.mxu0 %v280
        %v344 = vpop.f32.mrf.mxu0
        %v345 = vadd.f32 0.0, %v344
        %346 = vdwg.mxu0
        %347 = vmatpush.msra.mxu0 0.0
        %348 = vmatpush.msra.mxu0 0.0
        %349 = vmatpush.msra.mxu0 0.0
        %350 = vmatpush.msra.mxu0 0.0
        %351 = vmatpush.msra.mxu0 0.0
        %352 = vmatpush.msra.mxu0 0.0
        %353 = vmatpush.msra.mxu0 0.0
        %354 = vmatpush.msra.mxu0 0.0
        %355 = vmatpush.msra.mxu0 %v212
        %356 = vmatpush.msra.mxu0 %v208
        %357 = vmatpush.msra.mxu0 %v204
        %358 = vmatpush.msra.mxu0 %v200
        %359 = vmatpush.msra.mxu0 %v196
        %360 = vmatpush.msra.mxu0 %v192
        %361 = vmatpush.msra.mxu0 %v188
        %362 = vmatpush.msra.mxu0 %v184
        %363 = vmatmul.f32.gmra.mxu0 %v235
        %v364 = vpop.f32.mrf.mxu0
        %v365 = vadd.f32 0.0, %v364
        %366 = vmatmul.f32.gmra.mxu0 %v238
        %v367 = vpop.f32.mrf.mxu0
        %v368 = vadd.f32 0.0, %v367
        %369 = vmatmul.f32.gmra.mxu0 %v241
        %v370 = vpop.f32.mrf.mxu0
        %v371 = vadd.f32 0.0, %v370
        %372 = vmatmul.f32.gmra.mxu0 %v244
        %v373 = vpop.f32.mrf.mxu0
        %v374 = vadd.f32 0.0, %v373
        %375 = vmatmul.f32.gmra.mxu0 %v247
        %v376 = vpop.f32.mrf.mxu0
        %v377 = vadd.f32 0.0, %v376
        %378 = vmatmul.f32.gmra.mxu0 %v250
        %v379 = vpop.f32.mrf.mxu0
        %v380 = vadd.f32 0.0, %v379
        %381 = vmatmul.f32.gmra.mxu0 %v253
        %v382 = vpop.f32.mrf.mxu0
        %v383 = vadd.f32 0.0, %v382
        %384 = vmatmul.f32.gmra.mxu0 %v256
        %v385 = vpop.f32.mrf.mxu0
        %v386 = vadd.f32 0.0, %v385
        %387 = vmatmul.f32.gmra.mxu0 %v259
        %v388 = vpop.f32.mrf.mxu0
        %v389 = vadd.f32 0.0, %v388
        %390 = vmatmul.f32.gmra.mxu0 %v262
        %v391 = vpop.f32.mrf.mxu0
        %v392 = vadd.f32 0.0, %v391
        %393 = vmatmul.f32.gmra.mxu0 %v265
        %v394 = vpop.f32.mrf.mxu0
        %v395 = vadd.f32 0.0, %v394
        %396 = vmatmul.f32.gmra.mxu0 %v268
        %v397 = vpop.f32.mrf.mxu0
        %v398 = vadd.f32 0.0, %v397
        %399 = vmatmul.f32.gmra.mxu0 %v271
        %v400 = vpop.f32.mrf.mxu0
        %v401 = vadd.f32 0.0, %v400
        %402 = vmatmul.f32.gmra.mxu0 %v274
        %v403 = vpop.f32.mrf.mxu0
        %v404 = vadd.f32 0.0, %v403
        %405 = vmatmul.f32.gmra.mxu0 %v277
        %v406 = vpop.f32.mrf.mxu0
        %v407 = vadd.f32 0.0, %v406
        %408 = vmatmul.f32.gmra.mxu0 %v280
        %v409 = vpop.f32.mrf.mxu0
        %v410 = vadd.f32 0.0, %v409
        %411 = vdwg.mxu0
        %412 = vmatpush.msra.mxu0 0.0
        %413 = vmatpush.msra.mxu0 0.0
        %414 = vmatpush.msra.mxu0 0.0
        %415 = vmatpush.msra.mxu0 0.0
        %416 = vmatpush.msra.mxu0 0.0
        %417 = vmatpush.msra.mxu0 0.0
        %418 = vmatpush.msra.mxu0 0.0
        %419 = vmatpush.msra.mxu0 0.0
        %420 = vmatpush.msra.mxu0 %v213
        %421 = vmatpush.msra.mxu0 %v209
        %422 = vmatpush.msra.mxu0 %v205
        %423 = vmatpush.msra.mxu0 %v201
        %424 = vmatpush.msra.mxu0 %v197
        %425 = vmatpush.msra.mxu0 %v193
        %426 = vmatpush.msra.mxu0 %v189
        %427 = vmatpush.msra.mxu0 %v185
        %428 = vmatmul.f32.gmra.mxu0 %v235
        %v429 = vpop.f32.mrf.mxu0
        %v430 = vadd.f32 0.0, %v429
        %431 = vmatmul.f32.gmra.mxu0 %v238
        %v432 = vpop.f32.mrf.mxu0
        %v433 = vadd.f32 0.0, %v432
        %434 = vmatmul.f32.gmra.mxu0 %v241
        %v435 = vpop.f32.mrf.mxu0
        %v436 = vadd.f32 0.0, %v435
        %437 = vmatmul.f32.gmra.mxu0 %v244
        %v438 = vpop.f32.mrf.mxu0
        %v439 = vadd.f32 0.0, %v438
        %440 = vmatmul.f32.gmra.mxu0 %v247
        %v441 = vpop.f32.mrf.mxu0
        %v442 = vadd.f32 0.0, %v441
        %443 = vmatmul.f32.gmra.mxu0 %v250
        %v444 = vpop.f32.mrf.mxu0
        %v445 = vadd.f32 0.0, %v444
        %446 = vmatmul.f32.gmra.mxu0 %v253
        %v447 = vpop.f32.mrf.mxu0
        %v448 = vadd.f32 0.0, %v447
        %449 = vmatmul.f32.gmra.mxu0 %v256
        %v450 = vpop.f32.mrf.mxu0
        %v451 = vadd.f32 0.0, %v450
        %452 = vmatmul.f32.gmra.mxu0 %v259
        %v453 = vpop.f32.mrf.mxu0
        %v454 = vadd.f32 0.0, %v453
        %455 = vmatmul.f32.gmra.mxu0 %v262
        %v456 = vpop.f32.mrf.mxu0
        %v457 = vadd.f32 0.0, %v456
        %458 = vmatmul.f32.gmra.mxu0 %v265
        %v459 = vpop.f32.mrf.mxu0
        %v460 = vadd.f32 0.0, %v459
        %461 = vmatmul.f32.gmra.mxu0 %v268
        %v462 = vpop.f32.mrf.mxu0
        %v463 = vadd.f32 0.0, %v462
        %464 = vmatmul.f32.gmra.mxu0 %v271
        %v465 = vpop.f32.mrf.mxu0
        %v466 = vadd.f32 0.0, %v465
        %467 = vmatmul.f32.gmra.mxu0 %v274
        %v468 = vpop.f32.mrf.mxu0
        %v469 = vadd.f32 0.0, %v468
        %470 = vmatmul.f32.gmra.mxu0 %v277
        %v471 = vpop.f32.mrf.mxu0
        %v472 = vadd.f32 0.0, %v471
        %473 = vmatmul.f32.gmra.mxu0 %v280
        %v474 = vpop.f32.mrf.mxu0
        %v475 = vadd.f32 0.0, %v474
        %476 = vdwg.mxu0
        %477 = vmatpush.msra.mxu0 0.0
        %478 = vmatpush.msra.mxu0 0.0
        %479 = vmatpush.msra.mxu0 0.0
        %480 = vmatpush.msra.mxu0 0.0
        %481 = vmatpush.msra.mxu0 0.0
        %482 = vmatpush.msra.mxu0 0.0
        %483 = vmatpush.msra.mxu0 0.0
        %484 = vmatpush.msra.mxu0 0.0
        %485 = vmatpush.msra.mxu0 %v214
        %486 = vmatpush.msra.mxu0 %v210
        %487 = vmatpush.msra.mxu0 %v206
        %488 = vmatpush.msra.mxu0 %v202
        %489 = vmatpush.msra.mxu0 %v198
        %490 = vmatpush.msra.mxu0 %v194
        %491 = vmatpush.msra.mxu0 %v190
        %492 = vmatpush.msra.mxu0 %v186
        %493 = vmatmul.f32.gmra.mxu0 %v235
        %v494 = vpop.f32.mrf.mxu0
        %v495 = vadd.f32 0.0, %v494
        %496 = vmatmul.f32.gmra.mxu0 %v238
        %v497 = vpop.f32.mrf.mxu0
        %v498 = vadd.f32 0.0, %v497
        %499 = vmatmul.f32.gmra.mxu0 %v241
        %v500 = vpop.f32.mrf.mxu0
        %v501 = vadd.f32 0.0, %v500
        %502 = vmatmul.f32.gmra.mxu0 %v244
        %v503 = vpop.f32.mrf.mxu0
        %v504 = vadd.f32 0.0, %v503
        %505 = vmatmul.f32.gmra.mxu0 %v247
        %v506 = vpop.f32.mrf.mxu0
        %v507 = vadd.f32 0.0, %v506
        %508 = vmatmul.f32.gmra.mxu0 %v250
        %v509 = vpop.f32.mrf.mxu0
        %v510 = vadd.f32 0.0, %v509
        %511 = vmatmul.f32.gmra.mxu0 %v253
        %v512 = vpop.f32.mrf.mxu0
        %v513 = vadd.f32 0.0, %v512
        %514 = vmatmul.f32.gmra.mxu0 %v256
        %v515 = vpop.f32.mrf.mxu0
        %v516 = vadd.f32 0.0, %v515
        %517 = vmatmul.f32.gmra.mxu0 %v259
        %v518 = vpop.f32.mrf.mxu0
        %v519 = vadd.f32 0.0, %v518
        %520 = vmatmul.f32.gmra.mxu0 %v262
        %v521 = vpop.f32.mrf.mxu0
        %v522 = vadd.f32 0.0, %v521
        %523 = vmatmul.f32.gmra.mxu0 %v265
        %v524 = vpop.f32.mrf.mxu0
        %v525 = vadd.f32 0.0, %v524
        %526 = vmatmul.f32.gmra.mxu0 %v268
        %v527 = vpop.f32.mrf.mxu0
        %v528 = vadd.f32 0.0, %v527
        %529 = vmatmul.f32.gmra.mxu0 %v271
        %v530 = vpop.f32.mrf.mxu0
        %v531 = vadd.f32 0.0, %v530
        %532 = vmatmul.f32.gmra.mxu0 %v274
        %v533 = vpop.f32.mrf.mxu0
        %v534 = vadd.f32 0.0, %v533
        %535 = vmatmul.f32.gmra.mxu0 %v277
        %v536 = vpop.f32.mrf.mxu0
        %v537 = vadd.f32 0.0, %v536
        %538 = vmatmul.f32.gmra.mxu0 %v280
        %v539 = vpop.f32.mrf.mxu0
        %v540 = vadd.f32 0.0, %v539
        %541 = vdwg.mxu0
        %v542 = vperm.slane %v231, 0
        %v543 = vlaneseq
        %v544 = vshrl.u32 %v543, 7
        %546 = vset.pattern.permute.xlu0 %v544
        %547 = vperm.xlu0 %546, %v542
        %v548 = vpop.permute.xlu0 %547
        %v549 = vperm.slane %v231, 1
        %v550 = vlaneseq
        %v551 = vshrl.u32 %v550, 7
        %553 = vset.pattern.permute.xlu0 %v551
        %554 = vperm.xlu0 %553, %v549
        %v555 = vpop.permute.xlu0 %554
        %v556 = vperm.slane %v231, 2
        %v557 = vlaneseq
        %v558 = vshrl.u32 %v557, 7
        %560 = vset.pattern.permute.xlu0 %v558
        %561 = vperm.xlu0 %560, %v556
        %v562 = vpop.permute.xlu0 %561
        %v563 = vperm.slane %v231, 3
        %v564 = vlaneseq
        %v565 = vshrl.u32 %v564, 7
        %567 = vset.pattern.permute.xlu0 %v565
        %568 = vperm.xlu0 %567, %v563
        %v569 = vpop.permute.xlu0 %568
        %v570 = vperm.slane %v231, 4
        %v571 = vlaneseq
        %v572 = vshrl.u32 %v571, 7
        %574 = vset.pattern.permute.xlu0 %v572
        %575 = vperm.xlu0 %574, %v570
        %v576 = vpop.permute.xlu0 %575
        %v577 = vperm.slane %v231, 5
        %v578 = vlaneseq
        %v579 = vshrl.u32 %v578, 7
        %581 = vset.pattern.permute.xlu0 %v579
        %582 = vperm.xlu0 %581, %v577
        %v583 = vpop.permute.xlu0 %582
        %v584 = vperm.slane %v231, 6
        %v585 = vlaneseq
        %v586 = vshrl.u32 %v585, 7
        %588 = vset.pattern.permute.xlu0 %v586
        %589 = vperm.xlu0 %588, %v584
        %v590 = vpop.permute.xlu0 %589
        %v591 = vperm.slane %v231, 7
        %v592 = vlaneseq
        %v593 = vshrl.u32 %v592, 7
        %595 = vset.pattern.permute.xlu0 %v593
        %596 = vperm.xlu0 %595, %v591
        %v597 = vpop.permute.xlu0 %596
        %v598 = vperm.slane %v232, 0
        %v599 = vlaneseq
        %v600 = vshrl.u32 %v599, 7
        %602 = vset.pattern.permute.xlu0 %v600
        %603 = vperm.xlu0 %602, %v598
        %v604 = vpop.permute.xlu0 %603
        %v605 = vperm.slane %v232, 1
        %v606 = vlaneseq
        %v607 = vshrl.u32 %v606, 7
        %609 = vset.pattern.permute.xlu0 %v607
        %610 = vperm.xlu0 %609, %v605
        %v611 = vpop.permute.xlu0 %610
        %v612 = vperm.slane %v232, 2
        %v613 = vlaneseq
        %v614 = vshrl.u32 %v613, 7
        %616 = vset.pattern.permute.xlu0 %v614
        %617 = vperm.xlu0 %616, %v612
        %v618 = vpop.permute.xlu0 %617
        %v619 = vperm.slane %v232, 3
        %v620 = vlaneseq
        %v621 = vshrl.u32 %v620, 7
        %623 = vset.pattern.permute.xlu0 %v621
        %624 = vperm.xlu0 %623, %v619
        %v625 = vpop.permute.xlu0 %624
        %v626 = vperm.slane %v232, 4
        %v627 = vlaneseq
        %v628 = vshrl.u32 %v627, 7
        %630 = vset.pattern.permute.xlu0 %v628
        %631 = vperm.xlu0 %630, %v626
        %v632 = vpop.permute.xlu0 %631
        %v633 = vperm.slane %v232, 5
        %v634 = vlaneseq
        %v635 = vshrl.u32 %v634, 7
        %637 = vset.pattern.permute.xlu0 %v635
        %638 = vperm.xlu0 %637, %v633
        %v639 = vpop.permute.xlu0 %638
        %v640 = vperm.slane %v232, 6
        %v641 = vlaneseq
        %v642 = vshrl.u32 %v641, 7
        %644 = vset.pattern.permute.xlu0 %v642
        %645 = vperm.xlu0 %644, %v640
        %v646 = vpop.permute.xlu0 %645
        %v647 = vperm.slane %v232, 7
        %v648 = vlaneseq
        %v649 = vshrl.u32 %v648, 7
        %651 = vset.pattern.permute.xlu0 %v649
        %652 = vperm.xlu0 %651, %v647
        %v653 = vpop.permute.xlu0 %652
        %v654 = vadd.f32 %v300, %v548
        %v655 = vadd.f32 %v365, %v548
        %v656 = vadd.f32 %v430, %v548
        %v657 = vadd.f32 %v495, %v548
        %v658 = vadd.f32 %v303, %v555
        %v659 = vadd.f32 %v368, %v555
        %v660 = vadd.f32 %v433, %v555
        %v661 = vadd.f32 %v498, %v555
        %v662 = vadd.f32 %v306, %v562
        %v663 = vadd.f32 %v371, %v562
        %v664 = vadd.f32 %v436, %v562
        %v665 = vadd.f32 %v501, %v562
        %v666 = vadd.f32 %v309, %v569
        %v667 = vadd.f32 %v374, %v569
        %v668 = vadd.f32 %v439, %v569
        %v669 = vadd.f32 %v504, %v569
        %v670 = vadd.f32 %v312, %v576
        %v671 = vadd.f32 %v377, %v576
        %v672 = vadd.f32 %v442, %v576
        %v673 = vadd.f32 %v507, %v576
        %v674 = vadd.f32 %v315, %v583
        %v675 = vadd.f32 %v380, %v583
        %v676 = vadd.f32 %v445, %v583
        %v677 = vadd.f32 %v510, %v583
        %v678 = vadd.f32 %v318, %v590
        %v679 = vadd.f32 %v383, %v590
        %v680 = vadd.f32 %v448, %v590
        %v681 = vadd.f32 %v513, %v590
        %v682 = vadd.f32 %v321, %v597
        %v683 = vadd.f32 %v386, %v597
        %v684 = vadd.f32 %v451, %v597
        %v685 = vadd.f32 %v516, %v597
        %v686 = vadd.f32 %v324, %v604
        %v687 = vadd.f32 %v389, %v604
        %v688 = vadd.f32 %v454, %v604
        %v689 = vadd.f32 %v519, %v604
        %v690 = vadd.f32 %v327, %v611
        %v691 = vadd.f32 %v392, %v611
        %v692 = vadd.f32 %v457, %v611
        %v693 = vadd.f32 %v522, %v611
        %v694 = vadd.f32 %v330, %v618
        %v695 = vadd.f32 %v395, %v618
        %v696 = vadd.f32 %v460, %v618
        %v697 = vadd.f32 %v525, %v618
        %v698 = vadd.f32 %v333, %v625
        %v699 = vadd.f32 %v398, %v625
        %v700 = vadd.f32 %v463, %v625
        %v701 = vadd.f32 %v528, %v625
        %v702 = vadd.f32 %v336, %v632
        %v703 = vadd.f32 %v401, %v632
        %v704 = vadd.f32 %v466, %v632
        %v705 = vadd.f32 %v531, %v632
        %v706 = vadd.f32 %v339, %v639
        %v707 = vadd.f32 %v404, %v639
        %v708 = vadd.f32 %v469, %v639
        %v709 = vadd.f32 %v534, %v639
        %v710 = vadd.f32 %v342, %v646
        %v711 = vadd.f32 %v407, %v646
        %v712 = vadd.f32 %v472, %v646
        %v713 = vadd.f32 %v537, %v646
        %v714 = vadd.f32 %v345, %v653
        %v715 = vadd.f32 %v410, %v653
        %v716 = vadd.f32 %v475, %v653
        %v717 = vadd.f32 %v540, %v653
        %v718 = vadd.f32 %v654, %v658
        %v719 = vadd.f32 %v718, %v662
        %v720 = vadd.f32 %v719, %v666
        %v721 = vadd.f32 %v720, %v670
        %v722 = vadd.f32 %v721, %v674
        %v723 = vadd.f32 %v722, %v678
        %v724 = vadd.f32 %v723, %v682
        %v725 = vadd.f32 %v724, %v686
        %v726 = vadd.f32 %v725, %v690
        %v727 = vadd.f32 %v726, %v694
        %v728 = vadd.f32 %v727, %v698
        %v729 = vadd.f32 %v728, %v702
        %v730 = vadd.f32 %v729, %v706
        %v731 = vadd.f32 %v730, %v710
        %v732 = vadd.f32 %v731, %v714
        %v733 = vrot.slane %v732, 4
        %v734 = vadd.f32 %v732, %v733
        %v735 = vrot.slane %v734, 2
        %v736 = vadd.f32 %v734, %v735
        %v737 = vrot.slane %v736, 1
        %v738 = vadd.f32 %v736, %v737
        %v739 = vadd.f32 %v655, %v659
        %v740 = vadd.f32 %v739, %v663
        %v741 = vadd.f32 %v740, %v667
        %v742 = vadd.f32 %v741, %v671
        %v743 = vadd.f32 %v742, %v675
        %v744 = vadd.f32 %v743, %v679
        %v745 = vadd.f32 %v744, %v683
        %v746 = vadd.f32 %v745, %v687
        %v747 = vadd.f32 %v746, %v691
        %v748 = vadd.f32 %v747, %v695
        %v749 = vadd.f32 %v748, %v699
        %v750 = vadd.f32 %v749, %v703
        %v751 = vadd.f32 %v750, %v707
        %v752 = vadd.f32 %v751, %v711
        %v753 = vadd.f32 %v752, %v715
        %v754 = vrot.slane %v753, 4
        %v755 = vadd.f32 %v753, %v754
        %v756 = vrot.slane %v755, 2
        %v757 = vadd.f32 %v755, %v756
        %v758 = vrot.slane %v757, 1
        %v759 = vadd.f32 %v757, %v758
        %v760 = vadd.f32 %v656, %v660
        %v761 = vadd.f32 %v760, %v664
        %v762 = vadd.f32 %v761, %v668
        %v763 = vadd.f32 %v762, %v672
        %v764 = vadd.f32 %v763, %v676
        %v765 = vadd.f32 %v764, %v680
        %v766 = vadd.f32 %v765, %v684
        %v767 = vadd.f32 %v766, %v688
        %v768 = vadd.f32 %v767, %v692
        %v769 = vadd.f32 %v768, %v696
        %v770 = vadd.f32 %v769, %v700
        %v771 = vadd.f32 %v770, %v704
        %v772 = vadd.f32 %v771, %v708
        %v773 = vadd.f32 %v772, %v712
        %v774 = vadd.f32 %v773, %v716
        %v775 = vrot.slane %v774, 4
        %v776 = vadd.f32 %v774, %v775
        %v777 = vrot.slane %v776, 2
        %v778 = vadd.f32 %v776, %v777
        %v779 = vrot.slane %v778, 1
        %v780 = vadd.f32 %v778, %v779
        %v781 = vadd.f32 %v657, %v661
        %v782 = vadd.f32 %v781, %v665
        %v783 = vadd.f32 %v782, %v669
        %v784 = vadd.f32 %v783, %v673
        %v785 = vadd.f32 %v784, %v677
        %v786 = vadd.f32 %v785, %v681
        %v787 = vadd.f32 %v786, %v685
        %v788 = vadd.f32 %v787, %v689
        %v789 = vadd.f32 %v788, %v693
        %v790 = vadd.f32 %v789, %v697
        %v791 = vadd.f32 %v790, %v701
        %v792 = vadd.f32 %v791, %v705
        %v793 = vadd.f32 %v792, %v709
        %v794 = vadd.f32 %v793, %v713
        %v795 = vadd.f32 %v794, %v717
        %v796 = vrot.slane %v795, 4
        %v797 = vadd.f32 %v795, %v796
        %v798 = vrot.slane %v797, 2
        %v799 = vadd.f32 %v797, %v798
        %v800 = vrot.slane %v799, 1
        %v801 = vadd.f32 %v799, %v800
        %v802 = vmul.f32 %v738, 0.0078125
        %v803 = vmul.f32 %v759, 0.0078125
        %v804 = vmul.f32 %v780, 0.0078125
        %v805 = vmul.f32 %v801, 0.0078125
        %v806 = vsub.f32 %v654, %v802
        %v807 = vsub.f32 %v655, %v803
        %v808 = vsub.f32 %v656, %v804
        %v809 = vsub.f32 %v657, %v805
        %v810 = vsub.f32 %v658, %v802
        %v811 = vsub.f32 %v659, %v803
        %v812 = vsub.f32 %v660, %v804
        %v813 = vsub.f32 %v661, %v805
        %v814 = vsub.f32 %v662, %v802
        %v815 = vsub.f32 %v663, %v803
        %v816 = vsub.f32 %v664, %v804
        %v817 = vsub.f32 %v665, %v805
        %v818 = vsub.f32 %v666, %v802
        %v819 = vsub.f32 %v667, %v803
        %v820 = vsub.f32 %v668, %v804
        %v821 = vsub.f32 %v669, %v805
        %v822 = vsub.f32 %v670, %v802
        %v823 = vsub.f32 %v671, %v803
        %v824 = vsub.f32 %v672, %v804
        %v825 = vsub.f32 %v673, %v805
        %v826 = vsub.f32 %v674, %v802
        %v827 = vsub.f32 %v675, %v803
        %v828 = vsub.f32 %v676, %v804
        %v829 = vsub.f32 %v677, %v805
        %v830 = vsub.f32 %v678, %v802
        %v831 = vsub.f32 %v679, %v803
        %v832 = vsub.f32 %v680, %v804
        %v833 = vsub.f32 %v681, %v805
        %v834 = vsub.f32 %v682, %v802
        %v835 = vsub.f32 %v683, %v803
        %v836 = vsub.f32 %v684, %v804
        %v837 = vsub.f32 %v685, %v805
        %v838 = vsub.f32 %v686, %v802
        %v839 = vsub.f32 %v687, %v803
        %v840 = vsub.f32 %v688, %v804
        %v841 = vsub.f32 %v689, %v805
        %v842 = vsub.f32 %v690, %v802
        %v843 = vsub.f32 %v691, %v803
        %v844 = vsub.f32 %v692, %v804
        %v845 = vsub.f32 %v693, %v805
        %v846 = vsub.f32 %v694, %v802
        %v847 = vsub.f32 %v695, %v803
        %v848 = vsub.f32 %v696, %v804
        %v849 = vsub.f32 %v697, %v805
        %v850 = vsub.f32 %v698, %v802
        %v851 = vsub.f32 %v699, %v803
        %v852 = vsub.f32 %v700, %v804
        %v853 = vsub.f32 %v701, %v805
        %v854 = vsub.f32 %v702, %v802
        %v855 = vsub.f32 %v703, %v803
        %v856 = vsub.f32 %v704, %v804
        %v857 = vsub.f32 %v705, %v805
        %v858 = vsub.f32 %v706, %v802
        %v859 = vsub.f32 %v707, %v803
        %v860 = vsub.f32 %v708, %v804
        %v861 = vsub.f32 %v709, %v805
        %v862 = vsub.f32 %v710, %v802
        %v863 = vsub.f32 %v711, %v803
        %v864 = vsub.f32 %v712, %v804
        %v865 = vsub.f32 %v713, %v805
        %v866 = vsub.f32 %v714, %v802
        %v867 = vsub.f32 %v715, %v803
        %v868 = vsub.f32 %v716, %v804
        %v869 = vsub.f32 %v717, %v805
        %v870 = vmul.f32 %v806, %v806
        %v871 = vmul.f32 %v807, %v807
        %v872 = vmul.f32 %v808, %v808
        %v873 = vmul.f32 %v809, %v809
        %v874 = vmul.f32 %v810, %v810
        %v875 = vmul.f32 %v811, %v811
        %v876 = vmul.f32 %v812, %v812
        %v877 = vmul.f32 %v813, %v813
        %v878 = vmul.f32 %v814, %v814
        %v879 = vmul.f32 %v815, %v815
        %v880 = vmul.f32 %v816, %v816
        %v881 = vmul.f32 %v817, %v817
        %v882 = vmul.f32 %v818, %v818
        %v883 = vmul.f32 %v819, %v819
        %v884 = vmul.f32 %v820, %v820
        %v885 = vmul.f32 %v821, %v821
        %v886 = vmul.f32 %v822, %v822
        %v887 = vmul.f32 %v823, %v823
        %v888 = vmul.f32 %v824, %v824
        %v889 = vmul.f32 %v825, %v825
        %v890 = vmul.f32 %v826, %v826
        %v891 = vmul.f32 %v827, %v827
        %v892 = vmul.f32 %v828, %v828
        %v893 = vmul.f32 %v829, %v829
        %v894 = vmul.f32 %v830, %v830
        %v895 = vmul.f32 %v831, %v831
        %v896 = vmul.f32 %v832, %v832
        %v897 = vmul.f32 %v833, %v833
        %v898 = vmul.f32 %v834, %v834
        %v899 = vmul.f32 %v835, %v835
        %v900 = vmul.f32 %v836, %v836
        %v901 = vmul.f32 %v837, %v837
        %v902 = vmul.f32 %v838, %v838
        %v903 = vmul.f32 %v839, %v839
        %v904 = vmul.f32 %v840, %v840
        %v905 = vmul.f32 %v841, %v841
        %v906 = vmul.f32 %v842, %v842
        %v907 = vmul.f32 %v843, %v843
        %v908 = vmul.f32 %v844, %v844
        %v909 = vmul.f32 %v845, %v845
        %v910 = vmul.f32 %v846, %v846
        %v911 = vmul.f32 %v847, %v847
        %v912 = vmul.f32 %v848, %v848
        %v913 = vmul.f32 %v849, %v849
        %v914 = vmul.f32 %v850, %v850
        %v915 = vmul.f32 %v851, %v851
        %v916 = vmul.f32 %v852, %v852
        %v917 = vmul.f32 %v853, %v853
        %v918 = vmul.f32 %v854, %v854
        %v919 = vmul.f32 %v855, %v855
        %v920 = vmul.f32 %v856, %v856
        %v921 = vmul.f32 %v857, %v857
        %v922 = vmul.f32 %v858, %v858
        %v923 = vmul.f32 %v859, %v859
        %v924 = vmul.f32 %v860, %v860
        %v925 = vmul.f32 %v861, %v861
        %v926 = vmul.f32 %v862, %v862
        %v927 = vmul.f32 %v863, %v863
        %v928 = vmul.f32 %v864, %v864
        %v929 = vmul.f32 %v865, %v865
        %v930 = vmul.f32 %v866, %v866
        %v931 = vmul.f32 %v867, %v867
        %v932 = vmul.f32 %v868, %v868
        %v933 = vmul.f32 %v869, %v869
        %v934 = vadd.f32 %v870, %v874
        %v935 = vadd.f32 %v934, %v878
        %v936 = vadd.f32 %v935, %v882
        %v937 = vadd.f32 %v936, %v886
        %v938 = vadd.f32 %v937, %v890
        %v939 = vadd.f32 %v938, %v894
        %v940 = vadd.f32 %v939, %v898
        %v941 = vadd.f32 %v940, %v902
        %v942 = vadd.f32 %v941, %v906
        %v943 = vadd.f32 %v942, %v910
        %v944 = vadd.f32 %v943, %v914
        %v945 = vadd.f32 %v944, %v918
        %v946 = vadd.f32 %v945, %v922
        %v947 = vadd.f32 %v946, %v926
        %v948 = vadd.f32 %v947, %v930
        %v949 = vrot.slane %v948, 4
        %v950 = vadd.f32 %v948, %v949
        %v951 = vrot.slane %v950, 2
        %v952 = vadd.f32 %v950, %v951
        %v953 = vrot.slane %v952, 1
        %v954 = vadd.f32 %v952, %v953
        %v955 = vadd.f32 %v871, %v875
        %v956 = vadd.f32 %v955, %v879
        %v957 = vadd.f32 %v956, %v883
        %v958 = vadd.f32 %v957, %v887
        %v959 = vadd.f32 %v958, %v891
        %v960 = vadd.f32 %v959, %v895
        %v961 = vadd.f32 %v960, %v899
        %v962 = vadd.f32 %v961, %v903
        %v963 = vadd.f32 %v962, %v907
        %v964 = vadd.f32 %v963, %v911
        %v965 = vadd.f32 %v964, %v915
        %v966 = vadd.f32 %v965, %v919
        %v967 = vadd.f32 %v966, %v923
        %v968 = vadd.f32 %v967, %v927
        %v969 = vadd.f32 %v968, %v931
        %v970 = vrot.slane %v969, 4
        %v971 = vadd.f32 %v969, %v970
        %v972 = vrot.slane %v971, 2
        %v973 = vadd.f32 %v971, %v972
        %v974 = vrot.slane %v973, 1
        %v975 = vadd.f32 %v973, %v974
        %v976 = vadd.f32 %v872, %v876
        %v977 = vadd.f32 %v976, %v880
        %v978 = vadd.f32 %v977, %v884
        %v979 = vadd.f32 %v978, %v888
        %v980 = vadd.f32 %v979, %v892
        %v981 = vadd.f32 %v980, %v896
        %v982 = vadd.f32 %v981, %v900
        %v983 = vadd.f32 %v982, %v904
        %v984 = vadd.f32 %v983, %v908
        %v985 = vadd.f32 %v984, %v912
        %v986 = vadd.f32 %v985, %v916
        %v987 = vadd.f32 %v986, %v920
        %v988 = vadd.f32 %v987, %v924
        %v989 = vadd.f32 %v988, %v928
        %v990 = vadd.f32 %v989, %v932
        %v991 = vrot.slane %v990, 4
        %v992 = vadd.f32 %v990, %v991
        %v993 = vrot.slane %v992, 2
        %v994 = vadd.f32 %v992, %v993
        %v995 = vrot.slane %v994, 1
        %v996 = vadd.f32 %v994, %v995
        %v997 = vadd.f32 %v873, %v877
        %v998 = vadd.f32 %v997, %v881
        %v999 = vadd.f32 %v998, %v885
        %v1000 = vadd.f32 %v999, %v889
        %v1001 = vadd.f32 %v1000, %v893
        %v1002 = vadd.f32 %v1001, %v897
        %v1003 = vadd.f32 %v1002, %v901
        %v1004 = vadd.f32 %v1003, %v905
        %v1005 = vadd.f32 %v1004, %v909
        %v1006 = vadd.f32 %v1005, %v913
        %v1007 = vadd.f32 %v1006, %v917
        %v1008 = vadd.f32 %v1007, %v921
        %v1009 = vadd.f32 %v1008, %v925
        %v1010 = vadd.f32 %v1009, %v929
        %v1011 = vadd.f32 %v1010, %v933
        %v1012 = vrot.slane %v1011, 4
        %v1013 = vadd.f32 %v1011, %v1012
        %v1014 = vrot.slane %v1013, 2
        %v1015 = vadd.f32 %v1013, %v1014
        %v1016 = vrot.slane %v1015, 1
        %v1017 = vadd.f32 %v1015, %v1016
        %v1018 = vmul.f32 %v954, 0.007874016
        %v1019 = vmul.f32 %v975, 0.007874016
        %v1020 = vmul.f32 %v996, 0.007874016
        %v1021 = vmul.f32 %v1017, 0.007874016
        %v1022 = vrsqrt.pop %v1018
        %v1023 = vmul.f32 %v1022, %v1018
        %v1024 = vmul.f32 %v1023, %v1022
        %v1025 = vmul.f32 0.5, %v1024
        %v1026 = vsub.f32 1.5, %v1025
        %v1027 = vmul.f32 %v1022, %v1026
        %v1028 = vmul.f32 %v1018, %v1027
        %vm1029 = vcmp.eq.f32.partialorder %v1018, inf
        %v1030 = vsel %vm1029, %v1018, %v1028
        %vm1031 = vcmp.eq.f32.partialorder %v1018, 0.0
        %v1032 = vand.u32 %v1018, 2147483648
        %v1033 = vsel %vm1031, %v1032, %v1030
        %v1034 = vrsqrt.pop %v1019
        %v1035 = vmul.f32 %v1034, %v1019
        %v1036 = vmul.f32 %v1035, %v1034
        %v1037 = vmul.f32 0.5, %v1036
        %v1038 = vsub.f32 1.5, %v1037
        %v1039 = vmul.f32 %v1034, %v1038
        %v1040 = vmul.f32 %v1019, %v1039
        %vm1041 = vcmp.eq.f32.partialorder %v1019, inf
        %v1042 = vsel %vm1041, %v1019, %v1040
        %vm1043 = vcmp.eq.f32.partialorder %v1019, 0.0
        %v1044 = vand.u32 %v1019, 2147483648
        %v1045 = vsel %vm1043, %v1044, %v1042
        %v1046 = vrsqrt.pop %v1020
        %v1047 = vmul.f32 %v1046, %v1020
        %v1048 = vmul.f32 %v1047, %v1046
        %v1049 = vmul.f32 0.5, %v1048
        %v1050 = vsub.f32 1.5, %v1049
        %v1051 = vmul.f32 %v1046, %v1050
        %v1052 = vmul.f32 %v1020, %v1051
        %vm1053 = vcmp.eq.f32.partialorder %v1020, inf
        %v1054 = vsel %vm1053, %v1020, %v1052
        %vm1055 = vcmp.eq.f32.partialorder %v1020, 0.0
        %v1056 = vand.u32 %v1020, 2147483648
        %v1057 = vsel %vm1055, %v1056, %v1054
        %v1058 = vrsqrt.pop %v1021
        %v1059 = vmul.f32 %v1058, %v1021
        %v1060 = vmul.f32 %v1059, %v1058
        %v1061 = vmul.f32 0.5, %v1060
        %v1062 = vsub.f32 1.5, %v1061
        %v1063 = vmul.f32 %v1058, %v1062
        %v1064 = vmul.f32 %v1021, %v1063
        %vm1065 = vcmp.eq.f32.partialorder %v1021, inf
        %v1066 = vsel %vm1065, %v1021, %v1064
        %vm1067 = vcmp.eq.f32.partialorder %v1021, 0.0
        %v1068 = vand.u32 %v1021, 2147483648
        %v1069 = vsel %vm1067, %v1068, %v1066
        %v1070 = vadd.f32 %v1033, 1e-05
        %v1071 = vadd.f32 %v1045, 1e-05
        %v1072 = vadd.f32 %v1057, 1e-05
        %v1073 = vadd.f32 %v1069, 1e-05
        %v1074 = vrcp.pop %v1070
        %v1075 = vrcp.pop %v1071
        %v1076 = vrcp.pop %v1072
        %v1077 = vrcp.pop %v1073
        %v1078 = vmul.f32 %v806, %v1074
        %v1079 = vmul.f32 %v807, %v1075
        %v1080 = vmul.f32 %v808, %v1076
        %v1081 = vmul.f32 %v809, %v1077
        %v1082 = vmul.f32 %v810, %v1074
        %v1083 = vmul.f32 %v811, %v1075
        %v1084 = vmul.f32 %v812, %v1076
        %v1085 = vmul.f32 %v813, %v1077
        %v1086 = vmul.f32 %v814, %v1074
        %v1087 = vmul.f32 %v815, %v1075
        %v1088 = vmul.f32 %v816, %v1076
        %v1089 = vmul.f32 %v817, %v1077
        %v1090 = vmul.f32 %v818, %v1074
        %v1091 = vmul.f32 %v819, %v1075
        %v1092 = vmul.f32 %v820, %v1076
        %v1093 = vmul.f32 %v821, %v1077
        %v1094 = vmul.f32 %v822, %v1074
        %v1095 = vmul.f32 %v823, %v1075
        %v1096 = vmul.f32 %v824, %v1076
        %v1097 = vmul.f32 %v825, %v1077
        %v1098 = vmul.f32 %v826, %v1074
        %v1099 = vmul.f32 %v827, %v1075
        %v1100 = vmul.f32 %v828, %v1076
        %v1101 = vmul.f32 %v829, %v1077
        %v1102 = vmul.f32 %v830, %v1074
        %v1103 = vmul.f32 %v831, %v1075
        %v1104 = vmul.f32 %v832, %v1076
        %v1105 = vmul.f32 %v833, %v1077
        %v1106 = vmul.f32 %v834, %v1074
        %v1107 = vmul.f32 %v835, %v1075
        %v1108 = vmul.f32 %v836, %v1076
        %v1109 = vmul.f32 %v837, %v1077
        %v1110 = vmul.f32 %v838, %v1074
        %v1111 = vmul.f32 %v839, %v1075
        %v1112 = vmul.f32 %v840, %v1076
        %v1113 = vmul.f32 %v841, %v1077
        %v1114 = vmul.f32 %v842, %v1074
        %v1115 = vmul.f32 %v843, %v1075
        %v1116 = vmul.f32 %v844, %v1076
        %v1117 = vmul.f32 %v845, %v1077
        %v1118 = vmul.f32 %v846, %v1074
        %v1119 = vmul.f32 %v847, %v1075
        %v1120 = vmul.f32 %v848, %v1076
        %v1121 = vmul.f32 %v849, %v1077
        %v1122 = vmul.f32 %v850, %v1074
        %v1123 = vmul.f32 %v851, %v1075
        %v1124 = vmul.f32 %v852, %v1076
        %v1125 = vmul.f32 %v853, %v1077
        %v1126 = vmul.f32 %v854, %v1074
        %v1127 = vmul.f32 %v855, %v1075
        %v1128 = vmul.f32 %v856, %v1076
        %v1129 = vmul.f32 %v857, %v1077
        %v1130 = vmul.f32 %v858, %v1074
        %v1131 = vmul.f32 %v859, %v1075
        %v1132 = vmul.f32 %v860, %v1076
        %v1133 = vmul.f32 %v861, %v1077
        %v1134 = vmul.f32 %v862, %v1074
        %v1135 = vmul.f32 %v863, %v1075
        %v1136 = vmul.f32 %v864, %v1076
        %v1137 = vmul.f32 %v865, %v1077
        %v1138 = vmul.f32 %v866, %v1074
        %v1139 = vmul.f32 %v867, %v1075
        %v1140 = vmul.f32 %v868, %v1076
        %v1141 = vmul.f32 %v869, %v1077
        %v1142 = vmax.f32 %v1078, 0.0
        %v1143 = vmax.f32 %v1079, 0.0
        %v1144 = vmax.f32 %v1080, 0.0
        %v1145 = vmax.f32 %v1081, 0.0
        %v1146 = vmax.f32 %v1082, 0.0
        %v1147 = vmax.f32 %v1083, 0.0
        %v1148 = vmax.f32 %v1084, 0.0
        %v1149 = vmax.f32 %v1085, 0.0
        %v1150 = vmax.f32 %v1086, 0.0
        %v1151 = vmax.f32 %v1087, 0.0
        %v1152 = vmax.f32 %v1088, 0.0
        %v1153 = vmax.f32 %v1089, 0.0
        %v1154 = vmax.f32 %v1090, 0.0
        %v1155 = vmax.f32 %v1091, 0.0
        %v1156 = vmax.f32 %v1092, 0.0
        %v1157 = vmax.f32 %v1093, 0.0
        %v1158 = vmax.f32 %v1094, 0.0
        %v1159 = vmax.f32 %v1095, 0.0
        %v1160 = vmax.f32 %v1096, 0.0
        %v1161 = vmax.f32 %v1097, 0.0
        %v1162 = vmax.f32 %v1098, 0.0
        %v1163 = vmax.f32 %v1099, 0.0
        %v1164 = vmax.f32 %v1100, 0.0
        %v1165 = vmax.f32 %v1101, 0.0
        %v1166 = vmax.f32 %v1102, 0.0
        %v1167 = vmax.f32 %v1103, 0.0
        %v1168 = vmax.f32 %v1104, 0.0
        %v1169 = vmax.f32 %v1105, 0.0
        %v1170 = vmax.f32 %v1106, 0.0
        %v1171 = vmax.f32 %v1107, 0.0
        %v1172 = vmax.f32 %v1108, 0.0
        %v1173 = vmax.f32 %v1109, 0.0
        %v1174 = vmax.f32 %v1110, 0.0
        %v1175 = vmax.f32 %v1111, 0.0
        %v1176 = vmax.f32 %v1112, 0.0
        %v1177 = vmax.f32 %v1113, 0.0
        %v1178 = vmax.f32 %v1114, 0.0
        %v1179 = vmax.f32 %v1115, 0.0
        %v1180 = vmax.f32 %v1116, 0.0
        %v1181 = vmax.f32 %v1117, 0.0
        %v1182 = vmax.f32 %v1118, 0.0
        %v1183 = vmax.f32 %v1119, 0.0
        %v1184 = vmax.f32 %v1120, 0.0
        %v1185 = vmax.f32 %v1121, 0.0
        %v1186 = vmax.f32 %v1122, 0.0
        %v1187 = vmax.f32 %v1123, 0.0
        %v1188 = vmax.f32 %v1124, 0.0
        %v1189 = vmax.f32 %v1125, 0.0
        %v1190 = vmax.f32 %v1126, 0.0
        %v1191 = vmax.f32 %v1127, 0.0
        %v1192 = vmax.f32 %v1128, 0.0
        %v1193 = vmax.f32 %v1129, 0.0
        %v1194 = vmax.f32 %v1130, 0.0
        %v1195 = vmax.f32 %v1131, 0.0
        %v1196 = vmax.f32 %v1132, 0.0
        %v1197 = vmax.f32 %v1133, 0.0
        %v1198 = vmax.f32 %v1134, 0.0
        %v1199 = vmax.f32 %v1135, 0.0
        %v1200 = vmax.f32 %v1136, 0.0
        %v1201 = vmax.f32 %v1137, 0.0
        %v1202 = vmax.f32 %v1138, 0.0
        %v1203 = vmax.f32 %v1139, 0.0
        %v1204 = vmax.f32 %v1140, 0.0
        %v1205 = vmax.f32 %v1141, 0.0
        %v1206 = vld [vmem:[#allocation2 + $0x80] sm:$0xff]
        %v1207 = vld [vmem:[#allocation2 + $0x88] sm:$0xff]
        %v1208 = vld [vmem:[#allocation2 + $0x90] sm:$0xff]
        %v1209 = vld [vmem:[#allocation2 + $0x98] sm:$0xff]
        %v1210 = vld [vmem:[#allocation2 + $0xa0] sm:$0xff]
        %v1211 = vld [vmem:[#allocation2 + $0xa8] sm:$0xff]
        %v1212 = vld [vmem:[#allocation2 + $0xb0] sm:$0xff]
        %v1213 = vld [vmem:[#allocation2 + $0xb8] sm:$0xff]
        %v1214 = vld [vmem:[#allocation2 + $0x178] sm:$0xff]
        %1215 = vmatpush.msra.mxu0 %v1202
        %1216 = vmatpush.msra.mxu0 %v1198
        %1217 = vmatpush.msra.mxu0 %v1194
        %1218 = vmatpush.msra.mxu0 %v1190
        %1219 = vmatpush.msra.mxu0 %v1186
        %1220 = vmatpush.msra.mxu0 %v1182
        %1221 = vmatpush.msra.mxu0 %v1178
        %1222 = vmatpush.msra.mxu0 %v1174
        %1223 = vmatpush.msra.mxu0 %v1170
        %1224 = vmatpush.msra.mxu0 %v1166
        %1225 = vmatpush.msra.mxu0 %v1162
        %1226 = vmatpush.msra.mxu0 %v1158
        %1227 = vmatpush.msra.mxu0 %v1154
        %1228 = vmatpush.msra.mxu0 %v1150
        %1229 = vmatpush.msra.mxu0 %v1146
        %1230 = vmatpush.msra.mxu0 %v1142
        %1231 = vmatmul.f32.gmra.mxu0 %v1206
        %v1232 = vpop.f32.mrf.mxu0
        %v1233 = vadd.f32 0.0, %v1232
        %1234 = vmatmul.f32.gmra.mxu0 %v1207
        %v1235 = vpop.f32.mrf.mxu0
        %v1236 = vadd.f32 0.0, %v1235
        %1237 = vmatmul.f32.gmra.mxu0 %v1208
        %v1238 = vpop.f32.mrf.mxu0
        %v1239 = vadd.f32 0.0, %v1238
        %1240 = vmatmul.f32.gmra.mxu0 %v1209
        %v1241 = vpop.f32.mrf.mxu0
        %v1242 = vadd.f32 0.0, %v1241
        %1243 = vmatmul.f32.gmra.mxu0 %v1210
        %v1244 = vpop.f32.mrf.mxu0
        %v1245 = vadd.f32 0.0, %v1244
        %1246 = vmatmul.f32.gmra.mxu0 %v1211
        %v1247 = vpop.f32.mrf.mxu0
        %v1248 = vadd.f32 0.0, %v1247
        %1249 = vmatmul.f32.gmra.mxu0 %v1212
        %v1250 = vpop.f32.mrf.mxu0
        %v1251 = vadd.f32 0.0, %v1250
        %1252 = vmatmul.f32.gmra.mxu0 %v1213
        %v1253 = vpop.f32.mrf.mxu0
        %v1254 = vadd.f32 0.0, %v1253
        %1255 = vdwg.mxu0
        %1256 = vmatpush.msra.mxu0 %v1203
        %1257 = vmatpush.msra.mxu0 %v1199
        %1258 = vmatpush.msra.mxu0 %v1195
        %1259 = vmatpush.msra.mxu0 %v1191
        %1260 = vmatpush.msra.mxu0 %v1187
        %1261 = vmatpush.msra.mxu0 %v1183
        %1262 = vmatpush.msra.mxu0 %v1179
        %1263 = vmatpush.msra.mxu0 %v1175
        %1264 = vmatpush.msra.mxu0 %v1171
        %1265 = vmatpush.msra.mxu0 %v1167
        %1266 = vmatpush.msra.mxu0 %v1163
        %1267 = vmatpush.msra.mxu0 %v1159
        %1268 = vmatpush.msra.mxu0 %v1155
        %1269 = vmatpush.msra.mxu0 %v1151
        %1270 = vmatpush.msra.mxu0 %v1147
        %1271 = vmatpush.msra.mxu0 %v1143
        %1272 = vmatmul.f32.gmra.mxu0 %v1206
        %v1273 = vpop.f32.mrf.mxu0
        %v1274 = vadd.f32 0.0, %v1273
        %1275 = vmatmul.f32.gmra.mxu0 %v1207
        %v1276 = vpop.f32.mrf.mxu0
        %v1277 = vadd.f32 0.0, %v1276
        %1278 = vmatmul.f32.gmra.mxu0 %v1208
        %v1279 = vpop.f32.mrf.mxu0
        %v1280 = vadd.f32 0.0, %v1279
        %1281 = vmatmul.f32.gmra.mxu0 %v1209
        %v1282 = vpop.f32.mrf.mxu0
        %v1283 = vadd.f32 0.0, %v1282
        %1284 = vmatmul.f32.gmra.mxu0 %v1210
        %v1285 = vpop.f32.mrf.mxu0
        %v1286 = vadd.f32 0.0, %v1285
        %1287 = vmatmul.f32.gmra.mxu0 %v1211
        %v1288 = vpop.f32.mrf.mxu0
        %v1289 = vadd.f32 0.0, %v1288
        %1290 = vmatmul.f32.gmra.mxu0 %v1212
        %v1291 = vpop.f32.mrf.mxu0
        %v1292 = vadd.f32 0.0, %v1291
        %1293 = vmatmul.f32.gmra.mxu0 %v1213
        %v1294 = vpop.f32.mrf.mxu0
        %v1295 = vadd.f32 0.0, %v1294
        %1296 = vdwg.mxu0
        %1297 = vmatpush.msra.mxu0 %v1204
        %1298 = vmatpush.msra.mxu0 %v1200
        %1299 = vmatpush.msra.mxu0 %v1196
        %1300 = vmatpush.msra.mxu0 %v1192
        %1301 = vmatpush.msra.mxu0 %v1188
        %1302 = vmatpush.msra.mxu0 %v1184
        %1303 = vmatpush.msra.mxu0 %v1180
        %1304 = vmatpush.msra.mxu0 %v1176
        %1305 = vmatpush.msra.mxu0 %v1172
        %1306 = vmatpush.msra.mxu0 %v1168
        %1307 = vmatpush.msra.mxu0 %v1164
        %1308 = vmatpush.msra.mxu0 %v1160
        %1309 = vmatpush.msra.mxu0 %v1156
        %1310 = vmatpush.msra.mxu0 %v1152
        %1311 = vmatpush.msra.mxu0 %v1148
        %1312 = vmatpush.msra.mxu0 %v1144
        %1313 = vmatmul.f32.gmra.mxu0 %v1206
        %v1314 = vpop.f32.mrf.mxu0
        %v1315 = vadd.f32 0.0, %v1314
        %1316 = vmatmul.f32.gmra.mxu0 %v1207
        %v1317 = vpop.f32.mrf.mxu0
        %v1318 = vadd.f32 0.0, %v1317
        %1319 = vmatmul.f32.gmra.mxu0 %v1208
        %v1320 = vpop.f32.mrf.mxu0
        %v1321 = vadd.f32 0.0, %v1320
        %1322 = vmatmul.f32.gmra.mxu0 %v1209
        %v1323 = vpop.f32.mrf.mxu0
        %v1324 = vadd.f32 0.0, %v1323
        %1325 = vmatmul.f32.gmra.mxu0 %v1210
        %v1326 = vpop.f32.mrf.mxu0
        %v1327 = vadd.f32 0.0, %v1326
        %1328 = vmatmul.f32.gmra.mxu0 %v1211
        %v1329 = vpop.f32.mrf.mxu0
        %v1330 = vadd.f32 0.0, %v1329
        %1331 = vmatmul.f32.gmra.mxu0 %v1212
        %v1332 = vpop.f32.mrf.mxu0
        %v1333 = vadd.f32 0.0, %v1332
        %1334 = vmatmul.f32.gmra.mxu0 %v1213
        %v1335 = vpop.f32.mrf.mxu0
        %v1336 = vadd.f32 0.0, %v1335
        %1337 = vdwg.mxu0
        %1338 = vmatpush.msra.mxu0 %v1205
        %1339 = vmatpush.msra.mxu0 %v1201
        %1340 = vmatpush.msra.mxu0 %v1197
        %1341 = vmatpush.msra.mxu0 %v1193
        %1342 = vmatpush.msra.mxu0 %v1189
        %1343 = vmatpush.msra.mxu0 %v1185
        %1344 = vmatpush.msra.mxu0 %v1181
        %1345 = vmatpush.msra.mxu0 %v1177
        %1346 = vmatpush.msra.mxu0 %v1173
        %1347 = vmatpush.msra.mxu0 %v1169
        %1348 = vmatpush.msra.mxu0 %v1165
        %1349 = vmatpush.msra.mxu0 %v1161
        %1350 = vmatpush.msra.mxu0 %v1157
        %1351 = vmatpush.msra.mxu0 %v1153
        %1352 = vmatpush.msra.mxu0 %v1149
        %1353 = vmatpush.msra.mxu0 %v1145
        %1354 = vmatmul.f32.gmra.mxu0 %v1206
        %v1355 = vpop.f32.mrf.mxu0
        %v1356 = vadd.f32 0.0, %v1355
        %1357 = vmatmul.f32.gmra.mxu0 %v1207
        %v1358 = vpop.f32.mrf.mxu0
        %v1359 = vadd.f32 0.0, %v1358
        %1360 = vmatmul.f32.gmra.mxu0 %v1208
        %v1361 = vpop.f32.mrf.mxu0
        %v1362 = vadd.f32 0.0, %v1361
        %1363 = vmatmul.f32.gmra.mxu0 %v1209
        %v1364 = vpop.f32.mrf.mxu0
        %v1365 = vadd.f32 0.0, %v1364
        %1366 = vmatmul.f32.gmra.mxu0 %v1210
        %v1367 = vpop.f32.mrf.mxu0
        %v1368 = vadd.f32 0.0, %v1367
        %1369 = vmatmul.f32.gmra.mxu0 %v1211
        %v1370 = vpop.f32.mrf.mxu0
        %v1371 = vadd.f32 0.0, %v1370
        %1372 = vmatmul.f32.gmra.mxu0 %v1212
        %v1373 = vpop.f32.mrf.mxu0
        %v1374 = vadd.f32 0.0, %v1373
        %1375 = vmatmul.f32.gmra.mxu0 %v1213
        %v1376 = vpop.f32.mrf.mxu0
        %v1377 = vadd.f32 0.0, %v1376
        %1378 = vdwg.mxu0
        %v1379 = vperm.slane %v1214, 0
        %v1380 = vlaneseq
        %v1381 = vshrl.u32 %v1380, 7
        %1383 = vset.pattern.permute.xlu0 %v1381
        %1384 = vperm.xlu0 %1383, %v1379
        %v1385 = vpop.permute.xlu0 %1384
        %v1386 = vperm.slane %v1214, 1
        %v1387 = vlaneseq
        %v1388 = vshrl.u32 %v1387, 7
        %1390 = vset.pattern.permute.xlu0 %v1388
        %1391 = vperm.xlu0 %1390, %v1386
        %v1392 = vpop.permute.xlu0 %1391
        %v1393 = vperm.slane %v1214, 2
        %v1394 = vlaneseq
        %v1395 = vshrl.u32 %v1394, 7
        %1397 = vset.pattern.permute.xlu0 %v1395
        %1398 = vperm.xlu0 %1397, %v1393
        %v1399 = vpop.permute.xlu0 %1398
        %v1400 = vperm.slane %v1214, 3
        %v1401 = vlaneseq
        %v1402 = vshrl.u32 %v1401, 7
        %1404 = vset.pattern.permute.xlu0 %v1402
        %1405 = vperm.xlu0 %1404, %v1400
        %v1406 = vpop.permute.xlu0 %1405
        %v1407 = vperm.slane %v1214, 4
        %v1408 = vlaneseq
        %v1409 = vshrl.u32 %v1408, 7
        %1411 = vset.pattern.permute.xlu0 %v1409
        %1412 = vperm.xlu0 %1411, %v1407
        %v1413 = vpop.permute.xlu0 %1412
        %v1414 = vperm.slane %v1214, 5
        %v1415 = vlaneseq
        %v1416 = vshrl.u32 %v1415, 7
        %1418 = vset.pattern.permute.xlu0 %v1416
        %1419 = vperm.xlu0 %1418, %v1414
        %v1420 = vpop.permute.xlu0 %1419
        %v1421 = vperm.slane %v1214, 6
        %v1422 = vlaneseq
        %v1423 = vshrl.u32 %v1422, 7
        %1425 = vset.pattern.permute.xlu0 %v1423
        %1426 = vperm.xlu0 %1425, %v1421
        %v1427 = vpop.permute.xlu0 %1426
        %v1428 = vperm.slane %v1214, 7
        %v1429 = vlaneseq
        %v1430 = vshrl.u32 %v1429, 7
        %1432 = vset.pattern.permute.xlu0 %v1430
        %1433 = vperm.xlu0 %1432, %v1428
        %v1434 = vpop.permute.xlu0 %1433
        %v1435 = vadd.f32 %v1233, %v1385
        %v1436 = vadd.f32 %v1274, %v1385
        %v1437 = vadd.f32 %v1315, %v1385
        %v1438 = vadd.f32 %v1356, %v1385
        %v1439 = vadd.f32 %v1236, %v1392
        %v1440 = vadd.f32 %v1277, %v1392
        %v1441 = vadd.f32 %v1318, %v1392
        %v1442 = vadd.f32 %v1359, %v1392
        %v1443 = vadd.f32 %v1239, %v1399
        %v1444 = vadd.f32 %v1280, %v1399
        %v1445 = vadd.f32 %v1321, %v1399
        %v1446 = vadd.f32 %v1362, %v1399
        %v1447 = vadd.f32 %v1242, %v1406
        %v1448 = vadd.f32 %v1283, %v1406
        %v1449 = vadd.f32 %v1324, %v1406
        %v1450 = vadd.f32 %v1365, %v1406
        %v1451 = vadd.f32 %v1245, %v1413
        %v1452 = vadd.f32 %v1286, %v1413
        %v1453 = vadd.f32 %v1327, %v1413
        %v1454 = vadd.f32 %v1368, %v1413
        %v1455 = vadd.f32 %v1248, %v1420
        %v1456 = vadd.f32 %v1289, %v1420
        %v1457 = vadd.f32 %v1330, %v1420
        %v1458 = vadd.f32 %v1371, %v1420
        %v1459 = vadd.f32 %v1251, %v1427
        %v1460 = vadd.f32 %v1292, %v1427
        %v1461 = vadd.f32 %v1333, %v1427
        %v1462 = vadd.f32 %v1374, %v1427
        %v1463 = vadd.f32 %v1254, %v1434
        %v1464 = vadd.f32 %v1295, %v1434
        %v1465 = vadd.f32 %v1336, %v1434
        %v1466 = vadd.f32 %v1377, %v1434
        %v1467 = vadd.f32 %v1435, %v1439
        %v1468 = vadd.f32 %v1467, %v1443
        %v1469 = vadd.f32 %v1468, %v1447
        %v1470 = vadd.f32 %v1469, %v1451
        %v1471 = vadd.f32 %v1470, %v1455
        %v1472 = vadd.f32 %v1471, %v1459
        %v1473 = vadd.f32 %v1472, %v1463
        %v1474 = vrot.slane %v1473, 4
        %v1475 = vadd.f32 %v1473, %v1474
        %v1476 = vrot.slane %v1475, 2
        %v1477 = vadd.f32 %v1475, %v1476
        %v1478 = vrot.slane %v1477, 1
        %v1479 = vadd.f32 %v1477, %v1478
        %v1480 = vadd.f32 %v1436, %v1440
        %v1481 = vadd.f32 %v1480, %v1444
        %v1482 = vadd.f32 %v1481, %v1448
        %v1483 = vadd.f32 %v1482, %v1452
        %v1484 = vadd.f32 %v1483, %v1456
        %v1485 = vadd.f32 %v1484, %v1460
        %v1486 = vadd.f32 %v1485, %v1464
        %v1487 = vrot.slane %v1486, 4
        %v1488 = vadd.f32 %v1486, %v1487
        %v1489 = vrot.slane %v1488, 2
        %v1490 = vadd.f32 %v1488, %v1489
        %v1491 = vrot.slane %v1490, 1
        %v1492 = vadd.f32 %v1490, %v1491
        %v1493 = vadd.f32 %v1437, %v1441
        %v1494 = vadd.f32 %v1493, %v1445
        %v1495 = vadd.f32 %v1494, %v1449
        %v1496 = vadd.f32 %v1495, %v1453
        %v1497 = vadd.f32 %v1496, %v1457
        %v1498 = vadd.f32 %v1497, %v1461
        %v1499 = vadd.f32 %v1498, %v1465
        %v1500 = vrot.slane %v1499, 4
        %v1501 = vadd.f32 %v1499, %v1500
        %v1502 = vrot.slane %v1501, 2
        %v1503 = vadd.f32 %v1501, %v1502
        %v1504 = vrot.slane %v1503, 1
        %v1505 = vadd.f32 %v1503, %v1504
        %v1506 = vadd.f32 %v1438, %v1442
        %v1507 = vadd.f32 %v1506, %v1446
        %v1508 = vadd.f32 %v1507, %v1450
        %v1509 = vadd.f32 %v1508, %v1454
        %v1510 = vadd.f32 %v1509, %v1458
        %v1511 = vadd.f32 %v1510, %v1462
        %v1512 = vadd.f32 %v1511, %v1466
        %v1513 = vrot.slane %v1512, 4
        %v1514 = vadd.f32 %v1512, %v1513
        %v1515 = vrot.slane %v1514, 2
        %v1516 = vadd.f32 %v1514, %v1515
        %v1517 = vrot.slane %v1516, 1
        %v1518 = vadd.f32 %v1516, %v1517
        %v1519 = vmul.f32 %v1479, 0.015625
        %v1520 = vmul.f32 %v1492, 0.015625
        %v1521 = vmul.f32 %v1505, 0.015625
        %v1522 = vmul.f32 %v1518, 0.015625
        %v1523 = vsub.f32 %v1435, %v1519
        %v1524 = vsub.f32 %v1436, %v1520
        %v1525 = vsub.f32 %v1437, %v1521
        %v1526 = vsub.f32 %v1438, %v1522
        %v1527 = vsub.f32 %v1439, %v1519
        %v1528 = vsub.f32 %v1440, %v1520
        %v1529 = vsub.f32 %v1441, %v1521
        %v1530 = vsub.f32 %v1442, %v1522
        %v1531 = vsub.f32 %v1443, %v1519
        %v1532 = vsub.f32 %v1444, %v1520
        %v1533 = vsub.f32 %v1445, %v1521
        %v1534 = vsub.f32 %v1446, %v1522
        %v1535 = vsub.f32 %v1447, %v1519
        %v1536 = vsub.f32 %v1448, %v1520
        %v1537 = vsub.f32 %v1449, %v1521
        %v1538 = vsub.f32 %v1450, %v1522
        %v1539 = vsub.f32 %v1451, %v1519
        %v1540 = vsub.f32 %v1452, %v1520
        %v1541 = vsub.f32 %v1453, %v1521
        %v1542 = vsub.f32 %v1454, %v1522
        %v1543 = vsub.f32 %v1455, %v1519
        %v1544 = vsub.f32 %v1456, %v1520
        %v1545 = vsub.f32 %v1457, %v1521
        %v1546 = vsub.f32 %v1458, %v1522
        %v1547 = vsub.f32 %v1459, %v1519
        %v1548 = vsub.f32 %v1460, %v1520
        %v1549 = vsub.f32 %v1461, %v1521
        %v1550 = vsub.f32 %v1462, %v1522
        %v1551 = vsub.f32 %v1463, %v1519
        %v1552 = vsub.f32 %v1464, %v1520
        %v1553 = vsub.f32 %v1465, %v1521
        %v1554 = vsub.f32 %v1466, %v1522
        %v1555 = vmul.f32 %v1523, %v1523
        %v1556 = vmul.f32 %v1524, %v1524
        %v1557 = vmul.f32 %v1525, %v1525
        %v1558 = vmul.f32 %v1526, %v1526
        %v1559 = vmul.f32 %v1527, %v1527
        %v1560 = vmul.f32 %v1528, %v1528
        %v1561 = vmul.f32 %v1529, %v1529
        %v1562 = vmul.f32 %v1530, %v1530
        %v1563 = vmul.f32 %v1531, %v1531
        %v1564 = vmul.f32 %v1532, %v1532
        %v1565 = vmul.f32 %v1533, %v1533
        %v1566 = vmul.f32 %v1534, %v1534
        %v1567 = vmul.f32 %v1535, %v1535
        %v1568 = vmul.f32 %v1536, %v1536
        %v1569 = vmul.f32 %v1537, %v1537
        %v1570 = vmul.f32 %v1538, %v1538
        %v1571 = vmul.f32 %v1539, %v1539
        %v1572 = vmul.f32 %v1540, %v1540
        %v1573 = vmul.f32 %v1541, %v1541
        %v1574 = vmul.f32 %v1542, %v1542
        %v1575 = vmul.f32 %v1543, %v1543
        %v1576 = vmul.f32 %v1544, %v1544
        %v1577 = vmul.f32 %v1545, %v1545
        %v1578 = vmul.f32 %v1546, %v1546
        %v1579 = vmul.f32 %v1547, %v1547
        %v1580 = vmul.f32 %v1548, %v1548
        %v1581 = vmul.f32 %v1549, %v1549
        %v1582 = vmul.f32 %v1550, %v1550
        %v1583 = vmul.f32 %v1551, %v1551
        %v1584 = vmul.f32 %v1552, %v1552
        %v1585 = vmul.f32 %v1553, %v1553
        %v1586 = vmul.f32 %v1554, %v1554
        %v1587 = vadd.f32 %v1555, %v1559
        %v1588 = vadd.f32 %v1587, %v1563
        %v1589 = vadd.f32 %v1588, %v1567
        %v1590 = vadd.f32 %v1589, %v1571
        %v1591 = vadd.f32 %v1590, %v1575
        %v1592 = vadd.f32 %v1591, %v1579
        %v1593 = vadd.f32 %v1592, %v1583
        %v1594 = vrot.slane %v1593, 4
        %v1595 = vadd.f32 %v1593, %v1594
        %v1596 = vrot.slane %v1595, 2
        %v1597 = vadd.f32 %v1595, %v1596
        %v1598 = vrot.slane %v1597, 1
        %v1599 = vadd.f32 %v1597, %v1598
        %v1600 = vadd.f32 %v1556, %v1560
        %v1601 = vadd.f32 %v1600, %v1564
        %v1602 = vadd.f32 %v1601, %v1568
        %v1603 = vadd.f32 %v1602, %v1572
        %v1604 = vadd.f32 %v1603, %v1576
        %v1605 = vadd.f32 %v1604, %v1580
        %v1606 = vadd.f32 %v1605, %v1584
        %v1607 = vrot.slane %v1606, 4
        %v1608 = vadd.f32 %v1606, %v1607
        %v1609 = vrot.slane %v1608, 2
        %v1610 = vadd.f32 %v1608, %v1609
        %v1611 = vrot.slane %v1610, 1
        %v1612 = vadd.f32 %v1610, %v1611
        %v1613 = vadd.f32 %v1557, %v1561
        %v1614 = vadd.f32 %v1613, %v1565
        %v1615 = vadd.f32 %v1614, %v1569
        %v1616 = vadd.f32 %v1615, %v1573
        %v1617 = vadd.f32 %v1616, %v1577
        %v1618 = vadd.f32 %v1617, %v1581
        %v1619 = vadd.f32 %v1618, %v1585
        %v1620 = vrot.slane %v1619, 4
        %v1621 = vadd.f32 %v1619, %v1620
        %v1622 = vrot.slane %v1621, 2
        %v1623 = vadd.f32 %v1621, %v1622
        %v1624 = vrot.slane %v1623, 1
        %v1625 = vadd.f32 %v1623, %v1624
        %v1626 = vadd.f32 %v1558, %v1562
        %v1627 = vadd.f32 %v1626, %v1566
        %v1628 = vadd.f32 %v1627, %v1570
        %v1629 = vadd.f32 %v1628, %v1574
        %v1630 = vadd.f32 %v1629, %v1578
        %v1631 = vadd.f32 %v1630, %v1582
        %v1632 = vadd.f32 %v1631, %v1586
        %v1633 = vrot.slane %v1632, 4
        %v1634 = vadd.f32 %v1632, %v1633
        %v1635 = vrot.slane %v1634, 2
        %v1636 = vadd.f32 %v1634, %v1635
        %v1637 = vrot.slane %v1636, 1
        %v1638 = vadd.f32 %v1636, %v1637
        %v1639 = vmul.f32 %v1599, 0.015873017
        %v1640 = vmul.f32 %v1612, 0.015873017
        %v1641 = vmul.f32 %v1625, 0.015873017
        %v1642 = vmul.f32 %v1638, 0.015873017
        %v1643 = vrsqrt.pop %v1639
        %v1644 = vmul.f32 %v1643, %v1639
        %v1645 = vmul.f32 %v1644, %v1643
        %v1646 = vmul.f32 0.5, %v1645
        %v1647 = vsub.f32 1.5, %v1646
        %v1648 = vmul.f32 %v1643, %v1647
        %v1649 = vmul.f32 %v1639, %v1648
        %vm1650 = vcmp.eq.f32.partialorder %v1639, inf
        %v1651 = vsel %vm1650, %v1639, %v1649
        %vm1652 = vcmp.eq.f32.partialorder %v1639, 0.0
        %v1653 = vand.u32 %v1639, 2147483648
        %v1654 = vsel %vm1652, %v1653, %v1651
        %v1655 = vrsqrt.pop %v1640
        %v1656 = vmul.f32 %v1655, %v1640
        %v1657 = vmul.f32 %v1656, %v1655
        %v1658 = vmul.f32 0.5, %v1657
        %v1659 = vsub.f32 1.5, %v1658
        %v1660 = vmul.f32 %v1655, %v1659
        %v1661 = vmul.f32 %v1640, %v1660
        %vm1662 = vcmp.eq.f32.partialorder %v1640, inf
        %v1663 = vsel %vm1662, %v1640, %v1661
        %vm1664 = vcmp.eq.f32.partialorder %v1640, 0.0
        %v1665 = vand.u32 %v1640, 2147483648
        %v1666 = vsel %vm1664, %v1665, %v1663
        %v1667 = vrsqrt.pop %v1641
        %v1668 = vmul.f32 %v1667, %v1641
        %v1669 = vmul.f32 %v1668, %v1667
        %v1670 = vmul.f32 0.5, %v1669
        %v1671 = vsub.f32 1.5, %v1670
        %v1672 = vmul.f32 %v1667, %v1671
        %v1673 = vmul.f32 %v1641, %v1672
        %vm1674 = vcmp.eq.f32.partialorder %v1641, inf
        %v1675 = vsel %vm1674, %v1641, %v1673
        %vm1676 = vcmp.eq.f32.partialorder %v1641, 0.0
        %v1677 = vand.u32 %v1641, 2147483648
        %v1678 = vsel %vm1676, %v1677, %v1675
        %v1679 = vrsqrt.pop %v1642
        %v1680 = vmul.f32 %v1679, %v1642
        %v1681 = vmul.f32 %v1680, %v1679
        %v1682 = vmul.f32 0.5, %v1681
        %v1683 = vsub.f32 1.5, %v1682
        %v1684 = vmul.f32 %v1679, %v1683
        %v1685 = vmul.f32 %v1642, %v1684
        %vm1686 = vcmp.eq.f32.partialorder %v1642, inf
        %v1687 = vsel %vm1686, %v1642, %v1685
        %vm1688 = vcmp.eq.f32.partialorder %v1642, 0.0
        %v1689 = vand.u32 %v1642, 2147483648
        %v1690 = vsel %vm1688, %v1689, %v1687
        %v1691 = vadd.f32 %v1654, 1e-05
        %v1692 = vadd.f32 %v1666, 1e-05
        %v1693 = vadd.f32 %v1678, 1e-05
        %v1694 = vadd.f32 %v1690, 1e-05
        %v1695 = vrcp.pop %v1691
        %v1696 = vrcp.pop %v1692
        %v1697 = vrcp.pop %v1693
        %v1698 = vrcp.pop %v1694
        %v1699 = vmul.f32 %v1523, %v1695
        %v1700 = vmul.f32 %v1524, %v1696
        %v1701 = vmul.f32 %v1525, %v1697
        %v1702 = vmul.f32 %v1526, %v1698
        %v1703 = vmul.f32 %v1527, %v1695
        %v1704 = vmul.f32 %v1528, %v1696
        %v1705 = vmul.f32 %v1529, %v1697
        %v1706 = vmul.f32 %v1530, %v1698
        %v1707 = vmul.f32 %v1531, %v1695
        %v1708 = vmul.f32 %v1532, %v1696
        %v1709 = vmul.f32 %v1533, %v1697
        %v1710 = vmul.f32 %v1534, %v1698
        %v1711 = vmul.f32 %v1535, %v1695
        %v1712 = vmul.f32 %v1536, %v1696
        %v1713 = vmul.f32 %v1537, %v1697
        %v1714 = vmul.f32 %v1538, %v1698
        %v1715 = vmul.f32 %v1539, %v1695
        %v1716 = vmul.f32 %v1540, %v1696
        %v1717 = vmul.f32 %v1541, %v1697
        %v1718 = vmul.f32 %v1542, %v1698
        %v1719 = vmul.f32 %v1543, %v1695
        %v1720 = vmul.f32 %v1544, %v1696
        %v1721 = vmul.f32 %v1545, %v1697
        %v1722 = vmul.f32 %v1546, %v1698
        %v1723 = vmul.f32 %v1547, %v1695
        %v1724 = vmul.f32 %v1548, %v1696
        %v1725 = vmul.f32 %v1549, %v1697
        %v1726 = vmul.f32 %v1550, %v1698
        %v1727 = vmul.f32 %v1551, %v1695
        %v1728 = vmul.f32 %v1552, %v1696
        %v1729 = vmul.f32 %v1553, %v1697
        %v1730 = vmul.f32 %v1554, %v1698
        %v1731 = vmax.f32 %v1699, 0.0
        %v1732 = vmax.f32 %v1700, 0.0
        %v1733 = vmax.f32 %v1701, 0.0
        %v1734 = vmax.f32 %v1702, 0.0
        %v1735 = vmax.f32 %v1703, 0.0
        %v1736 = vmax.f32 %v1704, 0.0
        %v1737 = vmax.f32 %v1705, 0.0
        %v1738 = vmax.f32 %v1706, 0.0
        %v1739 = vmax.f32 %v1707, 0.0
        %v1740 = vmax.f32 %v1708, 0.0
        %v1741 = vmax.f32 %v1709, 0.0
        %v1742 = vmax.f32 %v1710, 0.0
        %v1743 = vmax.f32 %v1711, 0.0
        %v1744 = vmax.f32 %v1712, 0.0
        %v1745 = vmax.f32 %v1713, 0.0
        %v1746 = vmax.f32 %v1714, 0.0
        %v1747 = vmax.f32 %v1715, 0.0
        %v1748 = vmax.f32 %v1716, 0.0
        %v1749 = vmax.f32 %v1717, 0.0
        %v1750 = vmax.f32 %v1718, 0.0
        %v1751 = vmax.f32 %v1719, 0.0
        %v1752 = vmax.f32 %v1720, 0.0
        %v1753 = vmax.f32 %v1721, 0.0
        %v1754 = vmax.f32 %v1722, 0.0
        %v1755 = vmax.f32 %v1723, 0.0
        %v1756 = vmax.f32 %v1724, 0.0
        %v1757 = vmax.f32 %v1725, 0.0
        %v1758 = vmax.f32 %v1726, 0.0
        %v1759 = vmax.f32 %v1727, 0.0
        %v1760 = vmax.f32 %v1728, 0.0
        %v1761 = vmax.f32 %v1729, 0.0
        %v1762 = vmax.f32 %v1730, 0.0
        %v1763 = vld [vmem:[#allocation2 + $0xc0] sm:$0xff]
        %v1764 = vld [vmem:[#allocation2 + $0xc8] sm:$0xff]
        %v1765 = vld [vmem:[#allocation2 + $0xd0] sm:$0xff]
        %v1766 = vld [vmem:[#allocation2 + $0xd8] sm:$0xff]
        %v1767 = vld [vmem:[#allocation2 + $0x180] sm:$0xf]
        %v1769 = vsel %vm233, %v1763, 0
        %v1772 = vsel %vm233, %v1764, 0
        %v1775 = vsel %vm233, %v1765, 0
        %v1778 = vsel %vm233, %v1766, 0
        %1780 = vmatpush.msra.mxu0 0.0
        %1781 = vmatpush.msra.mxu0 0.0
        %1782 = vmatpush.msra.mxu0 0.0
        %1783 = vmatpush.msra.mxu0 0.0
        %1784 = vmatpush.msra.mxu0 0.0
        %1785 = vmatpush.msra.mxu0 0.0
        %1786 = vmatpush.msra.mxu0 0.0
        %1787 = vmatpush.msra.mxu0 0.0
        %1788 = vmatpush.msra.mxu0 %v1759
        %1789 = vmatpush.msra.mxu0 %v1755
        %1790 = vmatpush.msra.mxu0 %v1751
        %1791 = vmatpush.msra.mxu0 %v1747
        %1792 = vmatpush.msra.mxu0 %v1743
        %1793 = vmatpush.msra.mxu0 %v1739
        %1794 = vmatpush.msra.mxu0 %v1735
        %1795 = vmatpush.msra.mxu0 %v1731
        %1796 = vmatmul.f32.gmra.mxu0 %v1769
        %v1797 = vpop.f32.mrf.mxu0
        %v1798 = vadd.f32 0.0, %v1797
        %1799 = vmatmul.f32.gmra.mxu0 %v1772
        %v1800 = vpop.f32.mrf.mxu0
        %v1801 = vadd.f32 0.0, %v1800
        %1802 = vmatmul.f32.gmra.mxu0 %v1775
        %v1803 = vpop.f32.mrf.mxu0
        %v1804 = vadd.f32 0.0, %v1803
        %1805 = vmatmul.f32.gmra.mxu0 %v1778
        %v1806 = vpop.f32.mrf.mxu0
        %v1807 = vadd.f32 0.0, %v1806
        %1808 = vdwg.mxu0
        %1809 = vmatpush.msra.mxu0 0.0
        %1810 = vmatpush.msra.mxu0 0.0
        %1811 = vmatpush.msra.mxu0 0.0
        %1812 = vmatpush.msra.mxu0 0.0
        %1813 = vmatpush.msra.mxu0 0.0
        %1814 = vmatpush.msra.mxu0 0.0
        %1815 = vmatpush.msra.mxu0 0.0
        %1816 = vmatpush.msra.mxu0 0.0
        %1817 = vmatpush.msra.mxu0 %v1760
        %1818 = vmatpush.msra.mxu0 %v1756
        %1819 = vmatpush.msra.mxu0 %v1752
        %1820 = vmatpush.msra.mxu0 %v1748
        %1821 = vmatpush.msra.mxu0 %v1744
        %1822 = vmatpush.msra.mxu0 %v1740
        %1823 = vmatpush.msra.mxu0 %v1736
        %1824 = vmatpush.msra.mxu0 %v1732
        %1825 = vmatmul.f32.gmra.mxu0 %v1769
        %v1826 = vpop.f32.mrf.mxu0
        %v1827 = vadd.f32 0.0, %v1826
        %1828 = vmatmul.f32.gmra.mxu0 %v1772
        %v1829 = vpop.f32.mrf.mxu0
        %v1830 = vadd.f32 0.0, %v1829
        %1831 = vmatmul.f32.gmra.mxu0 %v1775
        %v1832 = vpop.f32.mrf.mxu0
        %v1833 = vadd.f32 0.0, %v1832
        %1834 = vmatmul.f32.gmra.mxu0 %v1778
        %v1835 = vpop.f32.mrf.mxu0
        %v1836 = vadd.f32 0.0, %v1835
        %1837 = vdwg.mxu0
        %1838 = vmatpush.msra.mxu0 0.0
        %1839 = vmatpush.msra.mxu0 0.0
        %1840 = vmatpush.msra.mxu0 0.0
        %1841 = vmatpush.msra.mxu0 0.0
        %1842 = vmatpush.msra.mxu0 0.0
        %1843 = vmatpush.msra.mxu0 0.0
        %1844 = vmatpush.msra.mxu0 0.0
        %1845 = vmatpush.msra.mxu0 0.0
        %1846 = vmatpush.msra.mxu0 %v1761
        %1847 = vmatpush.msra.mxu0 %v1757
        %1848 = vmatpush.msra.mxu0 %v1753
        %1849 = vmatpush.msra.mxu0 %v1749
        %1850 = vmatpush.msra.mxu0 %v1745
        %1851 = vmatpush.msra.mxu0 %v1741
        %1852 = vmatpush.msra.mxu0 %v1737
        %1853 = vmatpush.msra.mxu0 %v1733
        %1854 = vmatmul.f32.gmra.mxu0 %v1769
        %v1855 = vpop.f32.mrf.mxu0
        %v1856 = vadd.f32 0.0, %v1855
        %1857 = vmatmul.f32.gmra.mxu0 %v1772
        %v1858 = vpop.f32.mrf.mxu0
        %v1859 = vadd.f32 0.0, %v1858
        %1860 = vmatmul.f32.gmra.mxu0 %v1775
        %v1861 = vpop.f32.mrf.mxu0
        %v1862 = vadd.f32 0.0, %v1861
        %1863 = vmatmul.f32.gmra.mxu0 %v1778
        %v1864 = vpop.f32.mrf.mxu0
        %v1865 = vadd.f32 0.0, %v1864
        %1866 = vdwg.mxu0
        %1867 = vmatpush.msra.mxu0 0.0
        %1868 = vmatpush.msra.mxu0 0.0
        %1869 = vmatpush.msra.mxu0 0.0
        %1870 = vmatpush.msra.mxu0 0.0
        %1871 = vmatpush.msra.mxu0 0.0
        %1872 = vmatpush.msra.mxu0 0.0
        %1873 = vmatpush.msra.mxu0 0.0
        %1874 = vmatpush.msra.mxu0 0.0
        %1875 = vmatpush.msra.mxu0 %v1762
        %1876 = vmatpush.msra.mxu0 %v1758
        %1877 = vmatpush.msra.mxu0 %v1754
        %1878 = vmatpush.msra.mxu0 %v1750
        %1879 = vmatpush.msra.mxu0 %v1746
        %1880 = vmatpush.msra.mxu0 %v1742
        %1881 = vmatpush.msra.mxu0 %v1738
        %1882 = vmatpush.msra.mxu0 %v1734
        %1883 = vmatmul.f32.gmra.mxu0 %v1769
        %v1884 = vpop.f32.mrf.mxu0
        %v1885 = vadd.f32 0.0, %v1884
        %1886 = vmatmul.f32.gmra.mxu0 %v1772
        %v1887 = vpop.f32.mrf.mxu0
        %v1888 = vadd.f32 0.0, %v1887
        %1889 = vmatmul.f32.gmra.mxu0 %v1775
        %v1890 = vpop.f32.mrf.mxu0
        %v1891 = vadd.f32 0.0, %v1890
        %1892 = vmatmul.f32.gmra.mxu0 %v1778
        %v1893 = vpop.f32.mrf.mxu0
        %v1894 = vadd.f32 0.0, %v1893
        %1895 = vdwg.mxu0
        %v1896 = vperm.slane %v1767, 0
        %v1897 = vlaneseq
        %v1898 = vshrl.u32 %v1897, 7
        %1900 = vset.pattern.permute.xlu0 %v1898
        %1901 = vperm.xlu0 %1900, %v1896
        %v1902 = vpop.permute.xlu0 %1901
        %v1903 = vperm.slane %v1767, 1
        %v1904 = vlaneseq
        %v1905 = vshrl.u32 %v1904, 7
        %1907 = vset.pattern.permute.xlu0 %v1905
        %1908 = vperm.xlu0 %1907, %v1903
        %v1909 = vpop.permute.xlu0 %1908
        %v1910 = vperm.slane %v1767, 2
        %v1911 = vlaneseq
        %v1912 = vshrl.u32 %v1911, 7
        %1914 = vset.pattern.permute.xlu0 %v1912
        %1915 = vperm.xlu0 %1914, %v1910
        %v1916 = vpop.permute.xlu0 %1915
        %v1917 = vperm.slane %v1767, 3
        %v1918 = vlaneseq
        %v1919 = vshrl.u32 %v1918, 7
        %1921 = vset.pattern.permute.xlu0 %v1919
        %1922 = vperm.xlu0 %1921, %v1917
        %v1923 = vpop.permute.xlu0 %1922
        %v1924 = vadd.f32 %v1798, %v1902
        %v1925 = vadd.f32 %v1827, %v1902
        %v1926 = vadd.f32 %v1856, %v1902
        %v1927 = vadd.f32 %v1885, %v1902
        %v1928 = vadd.f32 %v1801, %v1909
        %v1929 = vadd.f32 %v1830, %v1909
        %v1930 = vadd.f32 %v1859, %v1909
        %v1931 = vadd.f32 %v1888, %v1909
        %v1932 = vadd.f32 %v1804, %v1916
        %v1933 = vadd.f32 %v1833, %v1916
        %v1934 = vadd.f32 %v1862, %v1916
        %v1935 = vadd.f32 %v1891, %v1916
        %v1936 = vadd.f32 %v1807, %v1923
        %v1937 = vadd.f32 %v1836, %v1923
        %v1938 = vadd.f32 %v1865, %v1923
        %v1939 = vadd.f32 %v1894, %v1923
        %v1940 = vadd.f32 %v1924, %v1928
        %v1941 = vadd.f32 %v1940, %v1932
        %v1942 = vadd.f32 %v1941, %v1936
        %v1943 = vrot.slane %v1942, 4
        %v1944 = vadd.f32 %v1942, %v1943
        %v1945 = vrot.slane %v1944, 2
        %v1946 = vadd.f32 %v1944, %v1945
        %v1947 = vrot.slane %v1946, 1
        %v1948 = vadd.f32 %v1946, %v1947
        %v1949 = vadd.f32 %v1925, %v1929
        %v1950 = vadd.f32 %v1949, %v1933
        %v1951 = vadd.f32 %v1950, %v1937
        %v1952 = vrot.slane %v1951, 4
        %v1953 = vadd.f32 %v1951, %v1952
        %v1954 = vrot.slane %v1953, 2
        %v1955 = vadd.f32 %v1953, %v1954
        %v1956 = vrot.slane %v1955, 1
        %v1957 = vadd.f32 %v1955, %v1956
        %v1958 = vadd.f32 %v1926, %v1930
        %v1959 = vadd.f32 %v1958, %v1934
        %v1960 = vadd.f32 %v1959, %v1938
        %v1961 = vrot.slane %v1960, 4
        %v1962 = vadd.f32 %v1960, %v1961
        %v1963 = vrot.slane %v1962, 2
        %v1964 = vadd.f32 %v1962, %v1963
        %v1965 = vrot.slane %v1964, 1
        %v1966 = vadd.f32 %v1964, %v1965
        %v1967 = vadd.f32 %v1927, %v1931
        %v1968 = vadd.f32 %v1967, %v1935
        %v1969 = vadd.f32 %v1968, %v1939
        %v1970 = vrot.slane %v1969, 4
        %v1971 = vadd.f32 %v1969, %v1970
        %v1972 = vrot.slane %v1971, 2
        %v1973 = vadd.f32 %v1971, %v1972
        %v1974 = vrot.slane %v1973, 1
        %v1975 = vadd.f32 %v1973, %v1974
        %v1976 = vmul.f32 %v1948, 0.03125
        %v1977 = vmul.f32 %v1957, 0.03125
        %v1978 = vmul.f32 %v1966, 0.03125
        %v1979 = vmul.f32 %v1975, 0.03125
        %v1980 = vsub.f32 %v1924, %v1976
        %v1981 = vsub.f32 %v1925, %v1977
        %v1982 = vsub.f32 %v1926, %v1978
        %v1983 = vsub.f32 %v1927, %v1979
        %v1984 = vsub.f32 %v1928, %v1976
        %v1985 = vsub.f32 %v1929, %v1977
        %v1986 = vsub.f32 %v1930, %v1978
        %v1987 = vsub.f32 %v1931, %v1979
        %v1988 = vsub.f32 %v1932, %v1976
        %v1989 = vsub.f32 %v1933, %v1977
        %v1990 = vsub.f32 %v1934, %v1978
        %v1991 = vsub.f32 %v1935, %v1979
        %v1992 = vsub.f32 %v1936, %v1976
        %v1993 = vsub.f32 %v1937, %v1977
        %v1994 = vsub.f32 %v1938, %v1978
        %v1995 = vsub.f32 %v1939, %v1979
        %v1996 = vmul.f32 %v1980, %v1980
        %v1997 = vmul.f32 %v1981, %v1981
        %v1998 = vmul.f32 %v1982, %v1982
        %v1999 = vmul.f32 %v1983, %v1983
        %v2000 = vmul.f32 %v1984, %v1984
        %v2001 = vmul.f32 %v1985, %v1985
        %v2002 = vmul.f32 %v1986, %v1986
        %v2003 = vmul.f32 %v1987, %v1987
        %v2004 = vmul.f32 %v1988, %v1988
        %v2005 = vmul.f32 %v1989, %v1989
        %v2006 = vmul.f32 %v1990, %v1990
        %v2007 = vmul.f32 %v1991, %v1991
        %v2008 = vmul.f32 %v1992, %v1992
        %v2009 = vmul.f32 %v1993, %v1993
        %v2010 = vmul.f32 %v1994, %v1994
        %v2011 = vmul.f32 %v1995, %v1995
        %v2012 = vadd.f32 %v1996, %v2000
        %v2013 = vadd.f32 %v2012, %v2004
        %v2014 = vadd.f32 %v2013, %v2008
        %v2015 = vrot.slane %v2014, 4
        %v2016 = vadd.f32 %v2014, %v2015
        %v2017 = vrot.slane %v2016, 2
        %v2018 = vadd.f32 %v2016, %v2017
        %v2019 = vrot.slane %v2018, 1
        %v2020 = vadd.f32 %v2018, %v2019
        %v2021 = vadd.f32 %v1997, %v2001
        %v2022 = vadd.f32 %v2021, %v2005
        %v2023 = vadd.f32 %v2022, %v2009
        %v2024 = vrot.slane %v2023, 4
        %v2025 = vadd.f32 %v2023, %v2024
        %v2026 = vrot.slane %v2025, 2
        %v2027 = vadd.f32 %v2025, %v2026
        %v2028 = vrot.slane %v2027, 1
        %v2029 = vadd.f32 %v2027, %v2028
        %v2030 = vadd.f32 %v1998, %v2002
        %v2031 = vadd.f32 %v2030, %v2006
        %v2032 = vadd.f32 %v2031, %v2010
        %v2033 = vrot.slane %v2032, 4
        %v2034 = vadd.f32 %v2032, %v2033
        %v2035 = vrot.slane %v2034, 2
        %v2036 = vadd.f32 %v2034, %v2035
        %v2037 = vrot.slane %v2036, 1
        %v2038 = vadd.f32 %v2036, %v2037
        %v2039 = vadd.f32 %v1999, %v2003
        %v2040 = vadd.f32 %v2039, %v2007
        %v2041 = vadd.f32 %v2040, %v2011
        %v2042 = vrot.slane %v2041, 4
        %v2043 = vadd.f32 %v2041, %v2042
        %v2044 = vrot.slane %v2043, 2
        %v2045 = vadd.f32 %v2043, %v2044
        %v2046 = vrot.slane %v2045, 1
        %v2047 = vadd.f32 %v2045, %v2046
        %v2048 = vmul.f32 %v2020, 0.032258064
        %v2049 = vmul.f32 %v2029, 0.032258064
        %v2050 = vmul.f32 %v2038, 0.032258064
        %v2051 = vmul.f32 %v2047, 0.032258064
        %v2052 = vrsqrt.pop %v2048
        %v2053 = vmul.f32 %v2052, %v2048
        %v2054 = vmul.f32 %v2053, %v2052
        %v2055 = vmul.f32 0.5, %v2054
        %v2056 = vsub.f32 1.5, %v2055
        %v2057 = vmul.f32 %v2052, %v2056
        %v2058 = vmul.f32 %v2048, %v2057
        %vm2059 = vcmp.eq.f32.partialorder %v2048, inf
        %v2060 = vsel %vm2059, %v2048, %v2058
        %vm2061 = vcmp.eq.f32.partialorder %v2048, 0.0
        %v2062 = vand.u32 %v2048, 2147483648
        %v2063 = vsel %vm2061, %v2062, %v2060
        %v2064 = vrsqrt.pop %v2049
        %v2065 = vmul.f32 %v2064, %v2049
        %v2066 = vmul.f32 %v2065, %v2064
        %v2067 = vmul.f32 0.5, %v2066
        %v2068 = vsub.f32 1.5, %v2067
        %v2069 = vmul.f32 %v2064, %v2068
        %v2070 = vmul.f32 %v2049, %v2069
        %vm2071 = vcmp.eq.f32.partialorder %v2049, inf
        %v2072 = vsel %vm2071, %v2049, %v2070
        %vm2073 = vcmp.eq.f32.partialorder %v2049, 0.0
        %v2074 = vand.u32 %v2049, 2147483648
        %v2075 = vsel %vm2073, %v2074, %v2072
        %v2076 = vrsqrt.pop %v2050
        %v2077 = vmul.f32 %v2076, %v2050
        %v2078 = vmul.f32 %v2077, %v2076
        %v2079 = vmul.f32 0.5, %v2078
        %v2080 = vsub.f32 1.5, %v2079
        %v2081 = vmul.f32 %v2076, %v2080
        %v2082 = vmul.f32 %v2050, %v2081
        %vm2083 = vcmp.eq.f32.partialorder %v2050, inf
        %v2084 = vsel %vm2083, %v2050, %v2082
        %vm2085 = vcmp.eq.f32.partialorder %v2050, 0.0
        %v2086 = vand.u32 %v2050, 2147483648
        %v2087 = vsel %vm2085, %v2086, %v2084
        %v2088 = vrsqrt.pop %v2051
        %v2089 = vmul.f32 %v2088, %v2051
        %v2090 = vmul.f32 %v2089, %v2088
        %v2091 = vmul.f32 0.5, %v2090
        %v2092 = vsub.f32 1.5, %v2091
        %v2093 = vmul.f32 %v2088, %v2092
        %v2094 = vmul.f32 %v2051, %v2093
        %vm2095 = vcmp.eq.f32.partialorder %v2051, inf
        %v2096 = vsel %vm2095, %v2051, %v2094
        %vm2097 = vcmp.eq.f32.partialorder %v2051, 0.0
        %v2098 = vand.u32 %v2051, 2147483648
        %v2099 = vsel %vm2097, %v2098, %v2096
        %v2100 = vadd.f32 %v2063, 1e-05
        %v2101 = vadd.f32 %v2075, 1e-05
        %v2102 = vadd.f32 %v2087, 1e-05
        %v2103 = vadd.f32 %v2099, 1e-05
        %v2104 = vrcp.pop %v2100
        %v2105 = vrcp.pop %v2101
        %v2106 = vrcp.pop %v2102
        %v2107 = vrcp.pop %v2103
        %v2108 = vmul.f32 %v1980, %v2104
        %v2109 = vmul.f32 %v1981, %v2105
        %v2110 = vmul.f32 %v1982, %v2106
        %v2111 = vmul.f32 %v1983, %v2107
        %v2112 = vmul.f32 %v1984, %v2104
        %v2113 = vmul.f32 %v1985, %v2105
        %v2114 = vmul.f32 %v1986, %v2106
        %v2115 = vmul.f32 %v1987, %v2107
        %v2116 = vmul.f32 %v1988, %v2104
        %v2117 = vmul.f32 %v1989, %v2105
        %v2118 = vmul.f32 %v1990, %v2106
        %v2119 = vmul.f32 %v1991, %v2107
        %v2120 = vmul.f32 %v1992, %v2104
        %v2121 = vmul.f32 %v1993, %v2105
        %v2122 = vmul.f32 %v1994, %v2106
        %v2123 = vmul.f32 %v1995, %v2107
        %v2124 = vmax.f32 %v2108, 0.0
        %v2125 = vmax.f32 %v2109, 0.0
        %v2126 = vmax.f32 %v2110, 0.0
        %v2127 = vmax.f32 %v2111, 0.0
        %v2128 = vmax.f32 %v2112, 0.0
        %v2129 = vmax.f32 %v2113, 0.0
        %v2130 = vmax.f32 %v2114, 0.0
        %v2131 = vmax.f32 %v2115, 0.0
        %v2132 = vmax.f32 %v2116, 0.0
        %v2133 = vmax.f32 %v2117, 0.0
        %v2134 = vmax.f32 %v2118, 0.0
        %v2135 = vmax.f32 %v2119, 0.0
        %v2136 = vmax.f32 %v2120, 0.0
        %v2137 = vmax.f32 %v2121, 0.0
        %v2138 = vmax.f32 %v2122, 0.0
        %v2139 = vmax.f32 %v2123, 0.0
        %v2140 = vrot.slane %v2124, 4
        %v2141 = vmax.f32 %v2124, %v2140
        %v2142 = vrot.slane %v2141, 2
        %v2143 = vmax.f32 %v2141, %v2142
        %v2144 = vrot.slane %v2143, 1
        %v2145 = vmax.f32 %v2143, %v2144
        %v2146 = vrot.slane %v2125, 4
        %v2147 = vmax.f32 %v2125, %v2146
        %v2148 = vrot.slane %v2147, 2
        %v2149 = vmax.f32 %v2147, %v2148
        %v2150 = vrot.slane %v2149, 1
        %v2151 = vmax.f32 %v2149, %v2150
        %v2152 = vrot.slane %v2126, 4
        %v2153 = vmax.f32 %v2126, %v2152
        %v2154 = vrot.slane %v2153, 2
        %v2155 = vmax.f32 %v2153, %v2154
        %v2156 = vrot.slane %v2155, 1
        %v2157 = vmax.f32 %v2155, %v2156
        %v2158 = vrot.slane %v2127, 4
        %v2159 = vmax.f32 %v2127, %v2158
        %v2160 = vrot.slane %v2159, 2
        %v2161 = vmax.f32 %v2159, %v2160
        %v2162 = vrot.slane %v2161, 1
        %v2163 = vmax.f32 %v2161, %v2162
        %v2164 = vrot.slane %v2128, 4
        %v2165 = vmax.f32 %v2128, %v2164
        %v2166 = vrot.slane %v2165, 2
        %v2167 = vmax.f32 %v2165, %v2166
        %v2168 = vrot.slane %v2167, 1
        %v2169 = vmax.f32 %v2167, %v2168
        %v2170 = vrot.slane %v2129, 4
        %v2171 = vmax.f32 %v2129, %v2170
        %v2172 = vrot.slane %v2171, 2
        %v2173 = vmax.f32 %v2171, %v2172
        %v2174 = vrot.slane %v2173, 1
        %v2175 = vmax.f32 %v2173, %v2174
        %v2176 = vrot.slane %v2130, 4
        %v2177 = vmax.f32 %v2130, %v2176
        %v2178 = vrot.slane %v2177, 2
        %v2179 = vmax.f32 %v2177, %v2178
        %v2180 = vrot.slane %v2179, 1
        %v2181 = vmax.f32 %v2179, %v2180
        %v2182 = vrot.slane %v2131, 4
        %v2183 = vmax.f32 %v2131, %v2182
        %v2184 = vrot.slane %v2183, 2
        %v2185 = vmax.f32 %v2183, %v2184
        %v2186 = vrot.slane %v2185, 1
        %v2187 = vmax.f32 %v2185, %v2186
        %v2188 = vrot.slane %v2132, 4
        %v2189 = vmax.f32 %v2132, %v2188
        %v2190 = vrot.slane %v2189, 2
        %v2191 = vmax.f32 %v2189, %v2190
        %v2192 = vrot.slane %v2191, 1
        %v2193 = vmax.f32 %v2191, %v2192
        %v2194 = vrot.slane %v2133, 4
        %v2195 = vmax.f32 %v2133, %v2194
        %v2196 = vrot.slane %v2195, 2
        %v2197 = vmax.f32 %v2195, %v2196
        %v2198 = vrot.slane %v2197, 1
        %v2199 = vmax.f32 %v2197, %v2198
        %v2200 = vrot.slane %v2134, 4
        %v2201 = vmax.f32 %v2134, %v2200
        %v2202 = vrot.slane %v2201, 2
        %v2203 = vmax.f32 %v2201, %v2202
        %v2204 = vrot.slane %v2203, 1
        %v2205 = vmax.f32 %v2203, %v2204
        %v2206 = vrot.slane %v2135, 4
        %v2207 = vmax.f32 %v2135, %v2206
        %v2208 = vrot.slane %v2207, 2
        %v2209 = vmax.f32 %v2207, %v2208
        %v2210 = vrot.slane %v2209, 1
        %v2211 = vmax.f32 %v2209, %v2210
        %v2212 = vrot.slane %v2136, 4
        %v2213 = vmax.f32 %v2136, %v2212
        %v2214 = vrot.slane %v2213, 2
        %v2215 = vmax.f32 %v2213, %v2214
        %v2216 = vrot.slane %v2215, 1
        %v2217 = vmax.f32 %v2215, %v2216
        %v2218 = vrot.slane %v2137, 4
        %v2219 = vmax.f32 %v2137, %v2218
        %v2220 = vrot.slane %v2219, 2
        %v2221 = vmax.f32 %v2219, %v2220
        %v2222 = vrot.slane %v2221, 1
        %v2223 = vmax.f32 %v2221, %v2222
        %v2224 = vrot.slane %v2138, 4
        %v2225 = vmax.f32 %v2138, %v2224
        %v2226 = vrot.slane %v2225, 2
        %v2227 = vmax.f32 %v2225, %v2226
        %v2228 = vrot.slane %v2227, 1
        %v2229 = vmax.f32 %v2227, %v2228
        %v2230 = vrot.slane %v2139, 4
        %v2231 = vmax.f32 %v2139, %v2230
        %v2232 = vrot.slane %v2231, 2
        %v2233 = vmax.f32 %v2231, %v2232
        %v2234 = vrot.slane %v2233, 1
        %v2235 = vmax.f32 %v2233, %v2234
        %v2236 = vld [vmem:[#allocation2 + $0xe0] sm:$0xff]
        %v2237 = vld [vmem:[#allocation2 + $0xe8] sm:$0xff]
        %v2238 = vld [vmem:[#allocation2 + $0xf0] sm:$0xff]
        %v2239 = vld [vmem:[#allocation2 + $0xf8] sm:$0xff]
        %v2240 = vld [vmem:[#allocation2 + $0x100] sm:$0xff]
        %v2241 = vld [vmem:[#allocation2 + $0x108] sm:$0xff]
        %v2242 = vld [vmem:[#allocation2 + $0x110] sm:$0xff]
        %v2243 = vld [vmem:[#allocation2 + $0x118] sm:$0xff]
        %v2244 = vld [vmem:[#allocation2 + $0x188] sm:$0xff]
        %v2245 = vld [vmem:[#allocation2 + $0x190] sm:$0xff]
        %v2246 = vld [vmem:[#allocation2 + $0x198] sm:$0xff]
        %v2247 = vld [vmem:[#allocation2 + $0x1a0] sm:$0xff]
        %v2248 = vld [vmem:[#allocation2 + $0x1a8] sm:$0xff]
        %v2249 = vld [vmem:[#allocation2 + $0x1b0] sm:$0xff]
        %v2250 = vld [vmem:[#allocation2 + $0x1b8] sm:$0xff]
        %v2251 = vld [vmem:[#allocation2 + $0x1c0] sm:$0xff]
        %2253 = vset.pattern.permute.xlu0 0
        %2254 = vperm.xlu0 %2253, %v2244
        %v2255 = vpop.permute.xlu0 %2254
        %2258 = vset.pattern.permute.xlu0 0
        %2259 = vperm.xlu0 %2258, %v2245
        %v2260 = vpop.permute.xlu0 %2259
        %2263 = vset.pattern.permute.xlu0 0
        %2264 = vperm.xlu0 %2263, %v2246
        %v2265 = vpop.permute.xlu0 %2264
        %2268 = vset.pattern.permute.xlu0 0
        %2269 = vperm.xlu0 %2268, %v2247
        %v2270 = vpop.permute.xlu0 %2269
        %2273 = vset.pattern.permute.xlu0 0
        %2274 = vperm.xlu0 %2273, %v2248
        %v2275 = vpop.permute.xlu0 %2274
        %2278 = vset.pattern.permute.xlu0 0
        %2279 = vperm.xlu0 %2278, %v2249
        %v2280 = vpop.permute.xlu0 %2279
        %2283 = vset.pattern.permute.xlu0 0
        %2284 = vperm.xlu0 %2283, %v2250
        %v2285 = vpop.permute.xlu0 %2284
        %2288 = vset.pattern.permute.xlu0 0
        %2289 = vperm.xlu0 %2288, %v2251
        %v2290 = vpop.permute.xlu0 %2289
        %vm2308 = vcmask 1041409
        %v2309 = vsel %vm2308, %v2169, %v2145
        %vm2310 = vcmask 1042434
        %v2311 = vsel %vm2310, %v2193, %v2309
        %vm2312 = vcmask 1043459
        %v2313 = vsel %vm2312, %v2217, %v2311
        %v2314 = vsel %vm2308, %v2175, %v2151
        %v2315 = vsel %vm2310, %v2199, %v2314
        %v2316 = vsel %vm2312, %v2223, %v2315
        %v2317 = vsel %vm2308, %v2181, %v2157
        %v2318 = vsel %vm2310, %v2205, %v2317
        %v2319 = vsel %vm2312, %v2229, %v2318
        %v2320 = vsel %vm2308, %v2187, %v2163
        %v2321 = vsel %vm2310, %v2211, %v2320
        %v2322 = vsel %vm2312, %v2235, %v2321
        %vm2323 = vcmask 31744
        %v2325 = vsel %vm2323, %v2236, 0
        %v2328 = vsel %vm2323, %v2237, 0
        %v2331 = vsel %vm2323, %v2238, 0
        %v2334 = vsel %vm2323, %v2239, 0
        %v2337 = vsel %vm2323, %v2240, 0
        %v2340 = vsel %vm2323, %v2241, 0
        %v2343 = vsel %vm2323, %v2242, 0
        %v2346 = vsel %vm2323, %v2243, 0
        %vm2348 = vcmask 1043456
        %v2349 = vsel %vm2348, %v2313, 0
        %v2351 = vsel %vm2348, %v2316, 0
        %v2353 = vsel %vm2348, %v2319, 0
        %v2355 = vsel %vm2348, %v2322, 0
        %2357 = vmatpush.msra.mxu0 0.0
        %2358 = vmatpush.msra.mxu0 0.0
        %2359 = vmatpush.msra.mxu0 0.0
        %2360 = vmatpush.msra.mxu0 0.0
        %2361 = vmatpush.msra.mxu0 0.0
        %2362 = vmatpush.msra.mxu0 0.0
        %2363 = vmatpush.msra.mxu0 0.0
        %2364 = vmatpush.msra.mxu0 0.0
        %2365 = vmatpush.msra.mxu0 0.0
        %2366 = vmatpush.msra.mxu0 0.0
        %2367 = vmatpush.msra.mxu0 0.0
        %2368 = vmatpush.msra.mxu0 0.0
        %2369 = vmatpush.msra.mxu0 0.0
        %2370 = vmatpush.msra.mxu0 0.0
        %2371 = vmatpush.msra.mxu0 0.0
        %2372 = vmatpush.msra.mxu0 %v2349
        %2373 = vmatmul.f32.gmra.mxu0 %v2325
        %v2374 = vpop.f32.mrf.mxu0
        %v2375 = vadd.f32 %v2255, %v2374
        %2376 = vmatmul.f32.gmra.mxu0 %v2328
        %v2377 = vpop.f32.mrf.mxu0
        %v2378 = vadd.f32 %v2260, %v2377
        %2379 = vmatmul.f32.gmra.mxu0 %v2331
        %v2380 = vpop.f32.mrf.mxu0
        %v2381 = vadd.f32 %v2265, %v2380
        %2382 = vmatmul.f32.gmra.mxu0 %v2334
        %v2383 = vpop.f32.mrf.mxu0
        %v2384 = vadd.f32 %v2270, %v2383
        %2385 = vmatmul.f32.gmra.mxu0 %v2337
        %v2386 = vpop.f32.mrf.mxu0
        %v2387 = vadd.f32 %v2275, %v2386
        %2388 = vmatmul.f32.gmra.mxu0 %v2340
        %v2389 = vpop.f32.mrf.mxu0
        %v2390 = vadd.f32 %v2280, %v2389
        %2391 = vmatmul.f32.gmra.mxu0 %v2343
        %v2392 = vpop.f32.mrf.mxu0
        %v2393 = vadd.f32 %v2285, %v2392
        %2394 = vmatmul.f32.gmra.mxu0 %v2346
        %v2395 = vpop.f32.mrf.mxu0
        %v2396 = vadd.f32 %v2290, %v2395
        %2397 = vdwg.mxu0
        %2398 = vmatpush.msra.mxu0 0.0
        %2399 = vmatpush.msra.mxu0 0.0
        %2400 = vmatpush.msra.mxu0 0.0
        %2401 = vmatpush.msra.mxu0 0.0
        %2402 = vmatpush.msra.mxu0 0.0
        %2403 = vmatpush.msra.mxu0 0.0
        %2404 = vmatpush.msra.mxu0 0.0
        %2405 = vmatpush.msra.mxu0 0.0
        %2406 = vmatpush.msra.mxu0 0.0
        %2407 = vmatpush.msra.mxu0 0.0
        %2408 = vmatpush.msra.mxu0 0.0
        %2409 = vmatpush.msra.mxu0 0.0
        %2410 = vmatpush.msra.mxu0 0.0
        %2411 = vmatpush.msra.mxu0 0.0
        %2412 = vmatpush.msra.mxu0 0.0
        %2413 = vmatpush.msra.mxu0 %v2351
        %2414 = vmatmul.f32.gmra.mxu0 %v2325
        %v2415 = vpop.f32.mrf.mxu0
        %v2416 = vadd.f32 %v2255, %v2415
        %2417 = vmatmul.f32.gmra.mxu0 %v2328
        %v2418 = vpop.f32.mrf.mxu0
        %v2419 = vadd.f32 %v2260, %v2418
        %2420 = vmatmul.f32.gmra.mxu0 %v2331
        %v2421 = vpop.f32.mrf.mxu0
        %v2422 = vadd.f32 %v2265, %v2421
        %2423 = vmatmul.f32.gmra.mxu0 %v2334
        %v2424 = vpop.f32.mrf.mxu0
        %v2425 = vadd.f32 %v2270, %v2424
        %2426 = vmatmul.f32.gmra.mxu0 %v2337
        %v2427 = vpop.f32.mrf.mxu0
        %v2428 = vadd.f32 %v2275, %v2427
        %2429 = vmatmul.f32.gmra.mxu0 %v2340
        %v2430 = vpop.f32.mrf.mxu0
        %v2431 = vadd.f32 %v2280, %v2430
        %2432 = vmatmul.f32.gmra.mxu0 %v2343
        %v2433 = vpop.f32.mrf.mxu0
        %v2434 = vadd.f32 %v2285, %v2433
        %2435 = vmatmul.f32.gmra.mxu0 %v2346
        %v2436 = vpop.f32.mrf.mxu0
        %v2437 = vadd.f32 %v2290, %v2436
        %2438 = vdwg.mxu0
        %2439 = vmatpush.msra.mxu0 0.0
        %2440 = vmatpush.msra.mxu0 0.0
        %2441 = vmatpush.msra.mxu0 0.0
        %2442 = vmatpush.msra.mxu0 0.0
        %2443 = vmatpush.msra.mxu0 0.0
        %2444 = vmatpush.msra.mxu0 0.0
        %2445 = vmatpush.msra.mxu0 0.0
        %2446 = vmatpush.msra.mxu0 0.0
        %2447 = vmatpush.msra.mxu0 0.0
        %2448 = vmatpush.msra.mxu0 0.0
        %2449 = vmatpush.msra.mxu0 0.0
        %2450 = vmatpush.msra.mxu0 0.0
        %2451 = vmatpush.msra.mxu0 0.0
        %2452 = vmatpush.msra.mxu0 0.0
        %2453 = vmatpush.msra.mxu0 0.0
        %2454 = vmatpush.msra.mxu0 %v2353
        %2455 = vmatmul.f32.gmra.mxu0 %v2325
        %v2456 = vpop.f32.mrf.mxu0
        %v2457 = vadd.f32 %v2255, %v2456
        %2458 = vmatmul.f32.gmra.mxu0 %v2328
        %v2459 = vpop.f32.mrf.mxu0
        %v2460 = vadd.f32 %v2260, %v2459
        %2461 = vmatmul.f32.gmra.mxu0 %v2331
        %v2462 = vpop.f32.mrf.mxu0
        %v2463 = vadd.f32 %v2265, %v2462
        %2464 = vmatmul.f32.gmra.mxu0 %v2334
        %v2465 = vpop.f32.mrf.mxu0
        %v2466 = vadd.f32 %v2270, %v2465
        %2467 = vmatmul.f32.gmra.mxu0 %v2337
        %v2468 = vpop.f32.mrf.mxu0
        %v2469 = vadd.f32 %v2275, %v2468
        %2470 = vmatmul.f32.gmra.mxu0 %v2340
        %v2471 = vpop.f32.mrf.mxu0
        %v2472 = vadd.f32 %v2280, %v2471
        %2473 = vmatmul.f32.gmra.mxu0 %v2343
        %v2474 = vpop.f32.mrf.mxu0
        %v2475 = vadd.f32 %v2285, %v2474
        %2476 = vmatmul.f32.gmra.mxu0 %v2346
        %v2477 = vpop.f32.mrf.mxu0
        %v2478 = vadd.f32 %v2290, %v2477
        %2479 = vdwg.mxu0
        %2480 = vmatpush.msra.mxu0 0.0
        %2481 = vmatpush.msra.mxu0 0.0
        %2482 = vmatpush.msra.mxu0 0.0
        %2483 = vmatpush.msra.mxu0 0.0
        %2484 = vmatpush.msra.mxu0 0.0
        %2485 = vmatpush.msra.mxu0 0.0
        %2486 = vmatpush.msra.mxu0 0.0
        %2487 = vmatpush.msra.mxu0 0.0
        %2488 = vmatpush.msra.mxu0 0.0
        %2489 = vmatpush.msra.mxu0 0.0
        %2490 = vmatpush.msra.mxu0 0.0
        %2491 = vmatpush.msra.mxu0 0.0
        %2492 = vmatpush.msra.mxu0 0.0
        %2493 = vmatpush.msra.mxu0 0.0
        %2494 = vmatpush.msra.mxu0 0.0
        %2495 = vmatpush.msra.mxu0 %v2355
        %2496 = vmatmul.f32.gmra.mxu0 %v2325
        %v2497 = vpop.f32.mrf.mxu0
        %v2498 = vadd.f32 %v2255, %v2497
        %2499 = vmatmul.f32.gmra.mxu0 %v2328
        %v2500 = vpop.f32.mrf.mxu0
        %v2501 = vadd.f32 %v2260, %v2500
        %2502 = vmatmul.f32.gmra.mxu0 %v2331
        %v2503 = vpop.f32.mrf.mxu0
        %v2504 = vadd.f32 %v2265, %v2503
        %2505 = vmatmul.f32.gmra.mxu0 %v2334
        %v2506 = vpop.f32.mrf.mxu0
        %v2507 = vadd.f32 %v2270, %v2506
        %2508 = vmatmul.f32.gmra.mxu0 %v2337
        %v2509 = vpop.f32.mrf.mxu0
        %v2510 = vadd.f32 %v2275, %v2509
        %2511 = vmatmul.f32.gmra.mxu0 %v2340
        %v2512 = vpop.f32.mrf.mxu0
        %v2513 = vadd.f32 %v2280, %v2512
        %2514 = vmatmul.f32.gmra.mxu0 %v2343
        %v2515 = vpop.f32.mrf.mxu0
        %v2516 = vadd.f32 %v2285, %v2515
        %2517 = vmatmul.f32.gmra.mxu0 %v2346
        %v2518 = vpop.f32.mrf.mxu0
        %v2519 = vadd.f32 %v2290, %v2518
        %2520 = vdwg.mxu0
        %v2521 = vmax.f32 %v2375, 0.0
        %v2522 = vmax.f32 %v2416, 0.0
        %v2523 = vmax.f32 %v2457, 0.0
        %v2524 = vmax.f32 %v2498, 0.0
        %v2525 = vmax.f32 %v2378, 0.0
        %v2526 = vmax.f32 %v2419, 0.0
        %v2527 = vmax.f32 %v2460, 0.0
        %v2528 = vmax.f32 %v2501, 0.0
        %v2529 = vmax.f32 %v2381, 0.0
        %v2530 = vmax.f32 %v2422, 0.0
        %v2531 = vmax.f32 %v2463, 0.0
        %v2532 = vmax.f32 %v2504, 0.0
        %v2533 = vmax.f32 %v2384, 0.0
        %v2534 = vmax.f32 %v2425, 0.0
        %v2535 = vmax.f32 %v2466, 0.0
        %v2536 = vmax.f32 %v2507, 0.0
        %v2537 = vmax.f32 %v2387, 0.0
        %v2538 = vmax.f32 %v2428, 0.0
        %v2539 = vmax.f32 %v2469, 0.0
        %v2540 = vmax.f32 %v2510, 0.0
        %v2541 = vmax.f32 %v2390, 0.0
        %v2542 = vmax.f32 %v2431, 0.0
        %v2543 = vmax.f32 %v2472, 0.0
        %v2544 = vmax.f32 %v2513, 0.0
        %v2545 = vmax.f32 %v2393, 0.0
        %v2546 = vmax.f32 %v2434, 0.0
        %v2547 = vmax.f32 %v2475, 0.0
        %v2548 = vmax.f32 %v2516, 0.0
        %v2549 = vmax.f32 %v2396, 0.0
        %v2550 = vmax.f32 %v2437, 0.0
        %v2551 = vmax.f32 %v2478, 0.0
        %v2552 = vmax.f32 %v2519, 0.0
        %v2553 = vld [vmem:[#allocation2 + $0x120] sm:$0xff]
        %v2554 = vld [vmem:[#allocation2 + $0x128] sm:$0xff]
        %v2555 = vld [vmem:[#allocation2 + $0x130] sm:$0xff]
        %v2556 = vld [vmem:[#allocation2 + $0x138] sm:$0xff]
        %v2557 = vld [vmem:[#allocation2 + $0x140] sm:$0xff]
        %v2558 = vld [vmem:[#allocation2 + $0x148] sm:$0xff]
        %v2559 = vld [vmem:[#allocation2 + $0x150] sm:$0xff]
        %v2560 = vld [vmem:[#allocation2 + $0x158] sm:$0xff]
        %v2561 = vld [vmem:[#allocation2 + $0x1c8] sm:$0xff]
        %v2562 = vld [vmem:[#allocation2 + $0x1d0] sm:$0xff]
        %v2563 = vld [vmem:[#allocation2 + $0x1d8] sm:$0xff]
        %v2564 = vld [vmem:[#allocation2 + $0x1e0] sm:$0xff]
        %v2565 = vld [vmem:[#allocation2 + $0x1e8] sm:$0xff]
        %v2566 = vld [vmem:[#allocation2 + $0x1f0] sm:$0xff]
        %v2567 = vld [vmem:[#allocation2 + $0x1f8] sm:$0xff]
        %v2568 = vld [vmem:[#allocation2 + $0x200] sm:$0xff]
        %2570 = vset.pattern.permute.xlu0 0
        %2571 = vperm.xlu0 %2570, %v2561
        %v2572 = vpop.permute.xlu0 %2571
        %2575 = vset.pattern.permute.xlu0 0
        %2576 = vperm.xlu0 %2575, %v2562
        %v2577 = vpop.permute.xlu0 %2576
        %2580 = vset.pattern.permute.xlu0 0
        %2581 = vperm.xlu0 %2580, %v2563
        %v2582 = vpop.permute.xlu0 %2581
        %2585 = vset.pattern.permute.xlu0 0
        %2586 = vperm.xlu0 %2585, %v2564
        %v2587 = vpop.permute.xlu0 %2586
        %2590 = vset.pattern.permute.xlu0 0
        %2591 = vperm.xlu0 %2590, %v2565
        %v2592 = vpop.permute.xlu0 %2591
        %2595 = vset.pattern.permute.xlu0 0
        %2596 = vperm.xlu0 %2595, %v2566
        %v2597 = vpop.permute.xlu0 %2596
        %2600 = vset.pattern.permute.xlu0 0
        %2601 = vperm.xlu0 %2600, %v2567
        %v2602 = vpop.permute.xlu0 %2601
        %2605 = vset.pattern.permute.xlu0 0
        %2606 = vperm.xlu0 %2605, %v2568
        %v2607 = vpop.permute.xlu0 %2606
        %v2610 = vsel %vm233, %v2553, 0
        %v2613 = vsel %vm233, %v2554, 0
        %v2616 = vsel %vm233, %v2555, 0
        %v2619 = vsel %vm233, %v2556, 0
        %v2622 = vsel %vm233, %v2557, 0
        %v2625 = vsel %vm233, %v2558, 0
        %v2628 = vsel %vm233, %v2559, 0
        %v2631 = vsel %vm233, %v2560, 0
        %2633 = vmatpush.msra.mxu0 0.0
        %2634 = vmatpush.msra.mxu0 0.0
        %2635 = vmatpush.msra.mxu0 0.0
        %2636 = vmatpush.msra.mxu0 0.0
        %2637 = vmatpush.msra.mxu0 0.0
        %2638 = vmatpush.msra.mxu0 0.0
        %2639 = vmatpush.msra.mxu0 0.0
        %2640 = vmatpush.msra.mxu0 0.0
        %2641 = vmatpush.msra.mxu0 %v2549
        %2642 = vmatpush.msra.mxu0 %v2545
        %2643 = vmatpush.msra.mxu0 %v2541
        %2644 = vmatpush.msra.mxu0 %v2537
        %2645 = vmatpush.msra.mxu0 %v2533
        %2646 = vmatpush.msra.mxu0 %v2529
        %2647 = vmatpush.msra.mxu0 %v2525
        %2648 = vmatpush.msra.mxu0 %v2521
        %2649 = vmatmul.f32.gmra.mxu0 %v2610
        %v2650 = vpop.f32.mrf.mxu0
        %v2651 = vadd.f32 %v2572, %v2650
        %2652 = vmatmul.f32.gmra.mxu0 %v2613
        %v2653 = vpop.f32.mrf.mxu0
        %v2654 = vadd.f32 %v2577, %v2653
        %2655 = vmatmul.f32.gmra.mxu0 %v2616
        %v2656 = vpop.f32.mrf.mxu0
        %v2657 = vadd.f32 %v2582, %v2656
        %2658 = vmatmul.f32.gmra.mxu0 %v2619
        %v2659 = vpop.f32.mrf.mxu0
        %v2660 = vadd.f32 %v2587, %v2659
        %2661 = vmatmul.f32.gmra.mxu0 %v2622
        %v2662 = vpop.f32.mrf.mxu0
        %v2663 = vadd.f32 %v2592, %v2662
        %2664 = vmatmul.f32.gmra.mxu0 %v2625
        %v2665 = vpop.f32.mrf.mxu0
        %v2666 = vadd.f32 %v2597, %v2665
        %2667 = vmatmul.f32.gmra.mxu0 %v2628
        %v2668 = vpop.f32.mrf.mxu0
        %v2669 = vadd.f32 %v2602, %v2668
        %2670 = vmatmul.f32.gmra.mxu0 %v2631
        %v2671 = vpop.f32.mrf.mxu0
        %v2672 = vadd.f32 %v2607, %v2671
        %2673 = vdwg.mxu0
        %2674 = vmatpush.msra.mxu0 0.0
        %2675 = vmatpush.msra.mxu0 0.0
        %2676 = vmatpush.msra.mxu0 0.0
        %2677 = vmatpush.msra.mxu0 0.0
        %2678 = vmatpush.msra.mxu0 0.0
        %2679 = vmatpush.msra.mxu0 0.0
        %2680 = vmatpush.msra.mxu0 0.0
        %2681 = vmatpush.msra.mxu0 0.0
        %2682 = vmatpush.msra.mxu0 %v2550
        %2683 = vmatpush.msra.mxu0 %v2546
        %2684 = vmatpush.msra.mxu0 %v2542
        %2685 = vmatpush.msra.mxu0 %v2538
        %2686 = vmatpush.msra.mxu0 %v2534
        %2687 = vmatpush.msra.mxu0 %v2530
        %2688 = vmatpush.msra.mxu0 %v2526
        %2689 = vmatpush.msra.mxu0 %v2522
        %2690 = vmatmul.f32.gmra.mxu0 %v2610
        %v2691 = vpop.f32.mrf.mxu0
        %v2692 = vadd.f32 %v2572, %v2691
        %2693 = vmatmul.f32.gmra.mxu0 %v2613
        %v2694 = vpop.f32.mrf.mxu0
        %v2695 = vadd.f32 %v2577, %v2694
        %2696 = vmatmul.f32.gmra.mxu0 %v2616
        %v2697 = vpop.f32.mrf.mxu0
        %v2698 = vadd.f32 %v2582, %v2697
        %2699 = vmatmul.f32.gmra.mxu0 %v2619
        %v2700 = vpop.f32.mrf.mxu0
        %v2701 = vadd.f32 %v2587, %v2700
        %2702 = vmatmul.f32.gmra.mxu0 %v2622
        %v2703 = vpop.f32.mrf.mxu0
        %v2704 = vadd.f32 %v2592, %v2703
        %2705 = vmatmul.f32.gmra.mxu0 %v2625
        %v2706 = vpop.f32.mrf.mxu0
        %v2707 = vadd.f32 %v2597, %v2706
        %2708 = vmatmul.f32.gmra.mxu0 %v2628
        %v2709 = vpop.f32.mrf.mxu0
        %v2710 = vadd.f32 %v2602, %v2709
        %2711 = vmatmul.f32.gmra.mxu0 %v2631
        %v2712 = vpop.f32.mrf.mxu0
        %v2713 = vadd.f32 %v2607, %v2712
        %2714 = vdwg.mxu0
        %2715 = vmatpush.msra.mxu0 0.0
        %2716 = vmatpush.msra.mxu0 0.0
        %2717 = vmatpush.msra.mxu0 0.0
        %2718 = vmatpush.msra.mxu0 0.0
        %2719 = vmatpush.msra.mxu0 0.0
        %2720 = vmatpush.msra.mxu0 0.0
        %2721 = vmatpush.msra.mxu0 0.0
        %2722 = vmatpush.msra.mxu0 0.0
        %2723 = vmatpush.msra.mxu0 %v2551
        %2724 = vmatpush.msra.mxu0 %v2547
        %2725 = vmatpush.msra.mxu0 %v2543
        %2726 = vmatpush.msra.mxu0 %v2539
        %2727 = vmatpush.msra.mxu0 %v2535
        %2728 = vmatpush.msra.mxu0 %v2531
        %2729 = vmatpush.msra.mxu0 %v2527
        %2730 = vmatpush.msra.mxu0 %v2523
        %2731 = vmatmul.f32.gmra.mxu0 %v2610
        %v2732 = vpop.f32.mrf.mxu0
        %v2733 = vadd.f32 %v2572, %v2732
        %2734 = vmatmul.f32.gmra.mxu0 %v2613
        %v2735 = vpop.f32.mrf.mxu0
        %v2736 = vadd.f32 %v2577, %v2735
        %2737 = vmatmul.f32.gmra.mxu0 %v2616
        %v2738 = vpop.f32.mrf.mxu0
        %v2739 = vadd.f32 %v2582, %v2738
        %2740 = vmatmul.f32.gmra.mxu0 %v2619
        %v2741 = vpop.f32.mrf.mxu0
        %v2742 = vadd.f32 %v2587, %v2741
        %2743 = vmatmul.f32.gmra.mxu0 %v2622
        %v2744 = vpop.f32.mrf.mxu0
        %v2745 = vadd.f32 %v2592, %v2744
        %2746 = vmatmul.f32.gmra.mxu0 %v2625
        %v2747 = vpop.f32.mrf.mxu0
        %v2748 = vadd.f32 %v2597, %v2747
        %2749 = vmatmul.f32.gmra.mxu0 %v2628
        %v2750 = vpop.f32.mrf.mxu0
        %v2751 = vadd.f32 %v2602, %v2750
        %2752 = vmatmul.f32.gmra.mxu0 %v2631
        %v2753 = vpop.f32.mrf.mxu0
        %v2754 = vadd.f32 %v2607, %v2753
        %2755 = vdwg.mxu0
        %2756 = vmatpush.msra.mxu0 0.0
        %2757 = vmatpush.msra.mxu0 0.0
        %2758 = vmatpush.msra.mxu0 0.0
        %2759 = vmatpush.msra.mxu0 0.0
        %2760 = vmatpush.msra.mxu0 0.0
        %2761 = vmatpush.msra.mxu0 0.0
        %2762 = vmatpush.msra.mxu0 0.0
        %2763 = vmatpush.msra.mxu0 0.0
        %2764 = vmatpush.msra.mxu0 %v2552
        %2765 = vmatpush.msra.mxu0 %v2548
        %2766 = vmatpush.msra.mxu0 %v2544
        %2767 = vmatpush.msra.mxu0 %v2540
        %2768 = vmatpush.msra.mxu0 %v2536
        %2769 = vmatpush.msra.mxu0 %v2532
        %2770 = vmatpush.msra.mxu0 %v2528
        %2771 = vmatpush.msra.mxu0 %v2524
        %2772 = vmatmul.f32.gmra.mxu0 %v2610
        %v2773 = vpop.f32.mrf.mxu0
        %v2774 = vadd.f32 %v2572, %v2773
        %2775 = vmatmul.f32.gmra.mxu0 %v2613
        %v2776 = vpop.f32.mrf.mxu0
        %v2777 = vadd.f32 %v2577, %v2776
        %2778 = vmatmul.f32.gmra.mxu0 %v2616
        %v2779 = vpop.f32.mrf.mxu0
        %v2780 = vadd.f32 %v2582, %v2779
        %2781 = vmatmul.f32.gmra.mxu0 %v2619
        %v2782 = vpop.f32.mrf.mxu0
        %v2783 = vadd.f32 %v2587, %v2782
        %2784 = vmatmul.f32.gmra.mxu0 %v2622
        %v2785 = vpop.f32.mrf.mxu0
        %v2786 = vadd.f32 %v2592, %v2785
        %2787 = vmatmul.f32.gmra.mxu0 %v2625
        %v2788 = vpop.f32.mrf.mxu0
        %v2789 = vadd.f32 %v2597, %v2788
        %2790 = vmatmul.f32.gmra.mxu0 %v2628
        %v2791 = vpop.f32.mrf.mxu0
        %v2792 = vadd.f32 %v2602, %v2791
        %2793 = vmatmul.f32.gmra.mxu0 %v2631
        %v2794 = vpop.f32.mrf.mxu0
        %v2795 = vadd.f32 %v2607, %v2794
        %2796 = vdwg.mxu0
        %v2797 = vmax.f32 %v2651, 0.0
        %v2798 = vmax.f32 %v2692, 0.0
        %v2799 = vmax.f32 %v2733, 0.0
        %v2800 = vmax.f32 %v2774, 0.0
        %v2801 = vmax.f32 %v2654, 0.0
        %v2802 = vmax.f32 %v2695, 0.0
        %v2803 = vmax.f32 %v2736, 0.0
        %v2804 = vmax.f32 %v2777, 0.0
        %v2805 = vmax.f32 %v2657, 0.0
        %v2806 = vmax.f32 %v2698, 0.0
        %v2807 = vmax.f32 %v2739, 0.0
        %v2808 = vmax.f32 %v2780, 0.0
        %v2809 = vmax.f32 %v2660, 0.0
        %v2810 = vmax.f32 %v2701, 0.0
        %v2811 = vmax.f32 %v2742, 0.0
        %v2812 = vmax.f32 %v2783, 0.0
        %v2813 = vmax.f32 %v2663, 0.0
        %v2814 = vmax.f32 %v2704, 0.0
        %v2815 = vmax.f32 %v2745, 0.0
        %v2816 = vmax.f32 %v2786, 0.0
        %v2817 = vmax.f32 %v2666, 0.0
        %v2818 = vmax.f32 %v2707, 0.0
        %v2819 = vmax.f32 %v2748, 0.0
        %v2820 = vmax.f32 %v2789, 0.0
        %v2821 = vmax.f32 %v2669, 0.0
        %v2822 = vmax.f32 %v2710, 0.0
        %v2823 = vmax.f32 %v2751, 0.0
        %v2824 = vmax.f32 %v2792, 0.0
        %v2825 = vmax.f32 %v2672, 0.0
        %v2826 = vmax.f32 %v2713, 0.0
        %v2827 = vmax.f32 %v2754, 0.0
        %v2828 = vmax.f32 %v2795, 0.0
        %v2829 = vld [vmem:[#allocation2 + $0x160] sm:$0xf]
        %v2830 = vld [vmem:[#allocation2 + $0x208] sm:$0xf]
        %2832 = vset.pattern.permute.xlu0 0
        %2833 = vperm.xlu0 %2832, %v2830
        %v2834 = vpop.permute.xlu0 %2833
        %v2837 = vsel %vm233, %v2829, 0
        %2839 = vmatpush.msra.mxu0 0.0
        %2840 = vmatpush.msra.mxu0 0.0
        %2841 = vmatpush.msra.mxu0 0.0
        %2842 = vmatpush.msra.mxu0 0.0
        %2843 = vmatpush.msra.mxu0 0.0
        %2844 = vmatpush.msra.mxu0 0.0
        %2845 = vmatpush.msra.mxu0 0.0
        %2846 = vmatpush.msra.mxu0 0.0
        %2847 = vmatpush.msra.mxu0 %v2825
        %2848 = vmatpush.msra.mxu0 %v2821
        %2849 = vmatpush.msra.mxu0 %v2817
        %2850 = vmatpush.msra.mxu0 %v2813
        %2851 = vmatpush.msra.mxu0 %v2809
        %2852 = vmatpush.msra.mxu0 %v2805
        %2853 = vmatpush.msra.mxu0 %v2801
        %2854 = vmatpush.msra.mxu0 %v2797
        %2855 = vmatmul.f32.gmra.mxu0 %v2837
        %v2856 = vpop.f32.mrf.mxu0
        %v2857 = vadd.f32 %v2834, %v2856
        %2858 = vdwg.mxu0
        %2859 = vmatpush.msra.mxu0 0.0
        %2860 = vmatpush.msra.mxu0 0.0
        %2861 = vmatpush.msra.mxu0 0.0
        %2862 = vmatpush.msra.mxu0 0.0
        %2863 = vmatpush.msra.mxu0 0.0
        %2864 = vmatpush.msra.mxu0 0.0
        %2865 = vmatpush.msra.mxu0 0.0
        %2866 = vmatpush.msra.mxu0 0.0
        %2867 = vmatpush.msra.mxu0 %v2826
        %2868 = vmatpush.msra.mxu0 %v2822
        %2869 = vmatpush.msra.mxu0 %v2818
        %2870 = vmatpush.msra.mxu0 %v2814
        %2871 = vmatpush.msra.mxu0 %v2810
        %2872 = vmatpush.msra.mxu0 %v2806
        %2873 = vmatpush.msra.mxu0 %v2802
        %2874 = vmatpush.msra.mxu0 %v2798
        %2875 = vmatmul.f32.gmra.mxu0 %v2837
        %v2876 = vpop.f32.mrf.mxu0
        %v2877 = vadd.f32 %v2834, %v2876
        %2878 = vdwg.mxu0
        %2879 = vmatpush.msra.mxu0 0.0
        %2880 = vmatpush.msra.mxu0 0.0
        %2881 = vmatpush.msra.mxu0 0.0
        %2882 = vmatpush.msra.mxu0 0.0
        %2883 = vmatpush.msra.mxu0 0.0
        %2884 = vmatpush.msra.mxu0 0.0
        %2885 = vmatpush.msra.mxu0 0.0
        %2886 = vmatpush.msra.mxu0 0.0
        %2887 = vmatpush.msra.mxu0 %v2827
        %2888 = vmatpush.msra.mxu0 %v2823
        %2889 = vmatpush.msra.mxu0 %v2819
        %2890 = vmatpush.msra.mxu0 %v2815
        %2891 = vmatpush.msra.mxu0 %v2811
        %2892 = vmatpush.msra.mxu0 %v2807
        %2893 = vmatpush.msra.mxu0 %v2803
        %2894 = vmatpush.msra.mxu0 %v2799
        %2895 = vmatmul.f32.gmra.mxu0 %v2837
        %v2896 = vpop.f32.mrf.mxu0
        %v2897 = vadd.f32 %v2834, %v2896
        %2898 = vdwg.mxu0
        %2899 = vmatpush.msra.mxu0 0.0
        %2900 = vmatpush.msra.mxu0 0.0
        %2901 = vmatpush.msra.mxu0 0.0
        %2902 = vmatpush.msra.mxu0 0.0
        %2903 = vmatpush.msra.mxu0 0.0
        %2904 = vmatpush.msra.mxu0 0.0
        %2905 = vmatpush.msra.mxu0 0.0
        %2906 = vmatpush.msra.mxu0 0.0
        %2907 = vmatpush.msra.mxu0 %v2828
        %2908 = vmatpush.msra.mxu0 %v2824
        %2909 = vmatpush.msra.mxu0 %v2820
        %2910 = vmatpush.msra.mxu0 %v2816
        %2911 = vmatpush.msra.mxu0 %v2812
        %2912 = vmatpush.msra.mxu0 %v2808
        %2913 = vmatpush.msra.mxu0 %v2804
        %2914 = vmatpush.msra.mxu0 %v2800
        %2915 = vmatmul.f32.gmra.mxu0 %v2837
        %v2916 = vpop.f32.mrf.mxu0
        %v2917 = vadd.f32 %v2834, %v2916
        %2918 = vdwg.mxu0
        %v2923 = vrot.slane %v2877, 4
        %v2924 = vrot.slane %v2917, 4
        %v2925 = vsel %vm2348, %v2857, %v2923
        %v2926 = vsel %vm2348, %v2897, %v2924
        %2929 = vst [vmem:[%s180] sm:$0xff] %v2925
        %2930 = vst [vmem:[%s180 + $0x8] sm:$0xff] %v2926
        %s2931 = sand.u32 %s75, 1
        %s2932 = scalar_lea.sflag [#allocation4], %s2931
        %s2933 = sand.u32 %s75, 1
        %s2934 = smul.addr %s2933, 16
        %s2935 = scalar_lea.vmem [#allocation7], %s2934
        // Predicated region
        $region37: #{tqnetwork_forward_lanes.1} parent=27 // pred_check
          %p2936 = pneg %p85
        $region38: #{tqnetwork_forward_lanes.1} parent=27 // pred_check_branch
          %2938 = sbr.rel (%p2936) target = $region40
        $region39: #{tqnetwork_forward_lanes.1} parent=27 // pred_region
          %s2939 = smul.u32 4, %s20
          %2941 = vsyncadd %s2932, 0
          %s2942 = smul.addr %s2939, 4
          %s2943 = scalar_lea.hbm %s2, %s2942
          %s2945 = sshll.u32 %s2935, 4
          %s2946 = int_to_ptr.vmem [resolvable:$true] %s2945
          %s2947 = sshll.u32 %s2943, 4
          %s2948 = int_to_ptr.hbm [resolvable:$true] %s2947
          %2950 = dma.vmem_to_hbm [thread:$0]  %s2946, 256, %s2948, %s2932
        $region40: #{tqnetwork_forward_lanes.1} parent=27 // pred_fallthru
          _
      $region28: #{tqnetwork_forward_lanes.1} parent=5 // pred_fallthru
        _
      %p2951 = scmp.le.s32.totalorder 2, %s15
      // Predicated region
      $region41: #{tqnetwork_forward_lanes.1} parent=5 // pred_check
        %p2952 = pneg %p2951
      $region42: #{tqnetwork_forward_lanes.1} parent=5 // pred_check_branch
        %2954 = sbr.rel (%p2952) target = $region44
      $region43: #{tqnetwork_forward_lanes.1} parent=5 // pred_region
        %s2955 = ssub.s32 %s15, 2
        // Predicated region
        $region45: #{tqnetwork_forward_lanes.1} parent=43 // pred_check
          %p2956 = pneg %p91
        $region46: #{tqnetwork_forward_lanes.1} parent=43 // pred_check_branch
          %2958 = sbr.rel (%p2956) target = $region48
        $region47: #{tqnetwork_forward_lanes.1} parent=43 // pred_region
          %s2959 = sand.u32 %s76, 1
          %s2960 = scalar_lea.sflag [#allocation4], %s2959
          %s2961 = sand.u32 %s76, 1
          %s2962 = smul.addr %s2961, 16
          %s2963 = scalar_lea.vmem [#allocation7], %s2962
          %2965 = dma.done %s2960, 256
        $region48: #{tqnetwork_forward_lanes.1} parent=43 // pred_fallthru
          _
      $region44: #{tqnetwork_forward_lanes.1} parent=5 // pred_fallthru
        _
    $region6: #{tqnetwork_forward_lanes.1} parent=1 // loop_footer
      %s19 = sadd.s32 1, %s15
    $region7: #{tqnetwork_forward_lanes.1} parent=1 // loop_footer_branch
      %14 = sbr.rel target = $region3
    $region8: #{tqnetwork_forward_lanes.1} parent=1 // loop_exit
      _
    %2966 = vsyncpa [#allocation3], 1
    %s2967 = scalar_lea.sflag [#allocation3], 1
    %2968 = vsyncpa %s2967, 1
    %2969 = vsyncpa [#allocation6], 1
    %s2970 = scalar_lea.sflag [#allocation6], 1
    %2971 = vsyncpa %s2970, 1
    %2972 = vsyncpa [#allocation4], 1
    %s2973 = scalar_lea.sflag [#allocation4], 1
    %2974 = vsyncpa %s2973, 1

</llo_original>
